<compile_context>
chip_gen: v6e
topology: v6e:2x2x1
jax: 0.10.0
libtpu: 0.0.40
codegen_flags: <defaults>
</compile_context>

<pallas_src>
import functools

import jax
import jax.numpy as jnp
from jax.experimental import pallas as pl
from jax.experimental.pallas import tpu as pltpu

LANE = 128


def _round_up(x, m):
    return ((x + m - 1) // m) * m


def _pick_tile(total, candidates):
    for c in candidates:
        if c <= total and total % c == 0:
            return c
    return total


def _pad2d(x, rows, cols):
    r, c = x.shape
    return jnp.pad(x, ((0, rows - r), (0, cols - c)))


# ---------------------------------------------------------------------------
# Layer 1: h = relu((A @ X) @ W1l + X @ W1r + b1),  p = h @ W2l   (pre-projection)
# ---------------------------------------------------------------------------
def _sage1_kernel(a_ref, xk_ref, xi_ref, w1l_ref, w1r_ref, b1_ref, w2l_ref,
                  h_ref, p_ref, acc_ref):
    k = pl.program_id(1)

    @pl.when(k == 0)
    def _():
        acc_ref[...] = jnp.zeros_like(acc_ref)

    # accumulate mean-aggregation: A row-tile @ X node-tile (bf16 in, f32 acc)
    acc_ref[...] += jnp.dot(a_ref[...], xk_ref[...],
                            preferred_element_type=jnp.float32)

    @pl.when(k == pl.num_programs(1) - 1)
    def _():
        agg = acc_ref[...].astype(jnp.bfloat16)                        # [TM, Fp]
        h = (jnp.dot(agg, w1l_ref[...], preferred_element_type=jnp.float32)
             + jnp.dot(xi_ref[...], w1r_ref[...],
                       preferred_element_type=jnp.float32)
             + b1_ref[...])                                            # [TM, Hp]
        h = jnp.maximum(h, 0.0)                                        # ReLU
        # TODO(synk): training-mode dropout not implemented; eval (identity) semantics.
        h_bf = h.astype(jnp.bfloat16)
        h_ref[...] = h_bf
        # Reassociation for layer 2: pre-project into the class dim so the big
        # N x N contraction in layer 2 runs at width Cp instead of Hp.
        p_ref[...] = jnp.dot(h_bf, w2l_ref[...],
                             preferred_element_type=jnp.float32).astype(jnp.bfloat16)


# ---------------------------------------------------------------------------
# Layer 2: z = A @ p + h @ W2r + b2 ; log_softmax over the real class lanes
# ---------------------------------------------------------------------------
def _sage2_kernel(a_ref, pk_ref, hi_ref, w2r_ref, b2_ref, o_ref, acc_ref, *,
                  num_classes):
    k = pl.program_id(1)

    @pl.when(k == 0)
    def _():
        acc_ref[...] = jnp.zeros_like(acc_ref)

    acc_ref[...] += jnp.dot(a_ref[...], pk_ref[...],
                            preferred_element_type=jnp.float32)

    @pl.when(k == pl.num_programs(1) - 1)
    def _():
        z = (acc_ref[...]
             + jnp.dot(hi_ref[...], w2r_ref[...],
                       preferred_element_type=jnp.float32)
             + b2_ref[...])                                            # [TM, Cp] f32
        lane = jax.lax.broadcasted_iota(jnp.int32, z.shape, 1)
        valid = lane < num_classes
        m = jnp.max(jnp.where(valid, z, -jnp.inf), axis=1, keepdims=True)
        s = z - m
        denom = jnp.sum(jnp.exp(jnp.where(valid, s, -jnp.inf)),
                        axis=1, keepdims=True)
        o_ref[...] = s - jnp.log(denom)


@functools.partial(jax.jit, static_argnames=("num_nodes",))
def graphsage_forward(x, edge_index, params, num_nodes):
    """x: [N, F] float32, edge_index: [2, E] int32 (row0=src, row1=dst)."""
    n = num_nodes
    feat = x.shape[1]
    hid = params["w1l"].shape[1]
    cls = params["w2l"].shape[1]

    # ---- dense row-normalized mean aggregation (glue, not the hot path) ----
    src, dst = edge_index[0], edge_index[1]
    adj = jnp.zeros((n, n), jnp.float32).at[dst, src].add(1.0)
    deg = jnp.sum(adj, axis=1, keepdims=True)
    a = adj / jnp.maximum(deg, 1.0)

    # ---- pad to lane-dense (multiples of 128) shapes, cast MXU inputs to bf16 ----
    n_p = _round_up(n, LANE)
    f_p = _round_up(feat, LANE)
    h_p = _round_up(hid, LANE)
    c_p = _round_up(cls, LANE)

    a_p = _pad2d(a, n_p, n_p).astype(jnp.bfloat16)
    x_p = _pad2d(x.astype(jnp.float32), n_p, f_p).astype(jnp.bfloat16)
    w1l = _pad2d(params["w1l"], f_p, h_p).astype(jnp.bfloat16)
    w1r = _pad2d(params["w1r"], f_p, h_p).astype(jnp.bfloat16)
    b1 = _pad2d(params["b1"].reshape(1, -1), 1, h_p).astype(jnp.float32)
    w2l = _pad2d(params["w2l"], h_p, c_p).astype(jnp.bfloat16)
    w2r = _pad2d(params["w2r"], h_p, c_p).astype(jnp.bfloat16)
    b2 = _pad2d(params["b2"].reshape(1, -1), 1, c_p).astype(jnp.float32)

    # row tile (parallel) and contraction tile (arbitrary) sizes
    tm = _pick_tile(n_p, (256, 128))
    tk = _pick_tile(n_p, (1024, 512, 256, 128))
    grid = (n_p // tm, n_p // tk)

    cparams = pltpu.CompilerParams(
        dimension_semantics=("parallel", "arbitrary"),
        vmem_limit_bytes=32 * 1024 * 1024,
    )

    # ---- layer 1 ----
    h_pad, p_pad = pl.pallas_call(
        _sage1_kernel,
        out_shape=(jax.ShapeDtypeStruct((n_p, h_p), jnp.bfloat16),
                   jax.ShapeDtypeStruct((n_p, c_p), jnp.bfloat16)),
        grid_spec=pltpu.PrefetchScalarGridSpec(
            num_scalar_prefetch=0,
            grid=grid,
            in_specs=[
                pl.BlockSpec((tm, tk), lambda i, k: (i, k)),    # A tile
                pl.BlockSpec((tk, f_p), lambda i, k: (k, 0)),   # X neighbor tile
                pl.BlockSpec((tm, f_p), lambda i, k: (i, 0)),   # X self tile
                pl.BlockSpec((f_p, h_p), lambda i, k: (0, 0)),  # W1l
                pl.BlockSpec((f_p, h_p), lambda i, k: (0, 0)),  # W1r
                pl.BlockSpec((1, h_p), lambda i, k: (0, 0)),    # b1
                pl.BlockSpec((h_p, c_p), lambda i, k: (0, 0)),  # W2l
            ],
            out_specs=[
                pl.BlockSpec((tm, h_p), lambda i, k: (i, 0)),
                pl.BlockSpec((tm, c_p), lambda i, k: (i, 0)),
            ],
            scratch_shapes=[pltpu.VMEM((tm, f_p), jnp.float32)],
        ),
        compiler_params=cparams,
    )(a_p, x_p, x_p, w1l, w1r, b1, w2l)

    # ---- layer 2 + log_softmax ----
    out_pad = pl.pallas_call(
        functools.partial(_sage2_kernel, num_classes=cls),
        out_shape=jax.ShapeDtypeStruct((n_p, c_p), jnp.float32),
        grid_spec=pltpu.PrefetchScalarGridSpec(
            num_scalar_prefetch=0,
            grid=grid,
            in_specs=[
                pl.BlockSpec((tm, tk), lambda i, k: (i, k)),    # A tile
                pl.BlockSpec((tk, c_p), lambda i, k: (k, 0)),   # p neighbor tile
                pl.BlockSpec((tm, h_p), lambda i, k: (i, 0)),   # h self tile
                pl.BlockSpec((h_p, c_p), lambda i, k: (0, 0)),  # W2r
                pl.BlockSpec((1, c_p), lambda i, k: (0, 0)),    # b2
            ],
            out_specs=pl.BlockSpec((tm, c_p), lambda i, k: (i, 0)),
            scratch_shapes=[pltpu.VMEM((tm, c_p), jnp.float32)],
        ),
        compiler_params=cparams,
    )(a_p, p_pad, h_pad, w2r, b2)

    return out_pad[:n, :cls]


def init_params(key, feature, hidden, classes):
    ks = jax.random.split(key, 4)

    def glorot(k, fan_in, fan_out):
        lim = jnp.sqrt(6.0 / (fan_in + fan_out))
        return jax.random.uniform(k, (fan_in, fan_out), jnp.float32, -lim, lim)

    return {
        "w1l": glorot(ks[0], feature, hidden),   # sage1 lin_l (with bias)
        "w1r": glorot(ks[1], feature, hidden),   # sage1 lin_r (no bias)
        "b1": jnp.zeros((1, hidden), jnp.float32),
        "w2l": glorot(ks[2], hidden, classes),
        "w2r": glorot(ks[3], hidden, classes),
        "b2": jnp.zeros((1, classes), jnp.float32),
    }


def _reference(x, edge_index, params, n):
    src, dst = edge_index[0], edge_index[1]
    adj = jnp.zeros((n, n), jnp.float32).at[dst, src].add(1.0)
    deg = jnp.sum(adj, axis=1, keepdims=True)
    a = adj / jnp.maximum(deg, 1.0)
    h = jnp.maximum(a @ x @ params["w1l"] + x @ params["w1r"] + params["b1"], 0.0)
    z = a @ h @ params["w2l"] + h @ params["w2r"] + params["b2"]
    return jax.nn.log_softmax(z, axis=1)


if __name__ == "__main__":
    key = jax.random.PRNGKey(0)
    N, FEAT, HID, CLS = 8, 16, 32, 8

    kx, kp = jax.random.split(key, 2)
    x = jax.random.normal(kx, (N, FEAT), jnp.float32)

    # small deterministic graph: a ring plus a few extra edges (both directions)
    src = jnp.array([0, 1, 2, 3, 4, 5, 6, 7, 1, 2, 3, 4, 5, 6, 7, 0, 0, 3, 5, 2],
                    dtype=jnp.int32)
    dst = jnp.array([1, 2, 3, 4, 5, 6, 7, 0, 0, 1, 2, 3, 4, 5, 6, 7, 4, 7, 1, 6],
                    dtype=jnp.int32)
    edge_index = jnp.stack([src, dst], axis=0)

    params = init_params(kp, FEAT, HID, CLS)

    out = graphsage_forward(x, edge_index, params, num_nodes=N)
    out = jax.block_until_ready(out)

    assert out.shape == (N, CLS)
    # rows should be valid log-probabilities (f32 log_softmax inside the kernel)
    probs_sum = jnp.sum(jnp.exp(out), axis=1)
    assert bool(jnp.all(jnp.abs(probs_sum - 1.0) < 1e-3))
    # match the pure-JAX f32 reference within bf16-MXU tolerance
    ref = _reference(x, edge_index, params, N)
    assert bool(jnp.max(jnp.abs(out - ref)) < 0.1)

    print("KERNEL_OK")
</pallas_src>

<mosaic_0001>
module attributes {stable_mosaic.version = 11 : i64} {
  func.func @_sage1_kernel(%arg0: i32, %arg1: i32, %arg2: memref<128x128xbf16, #tpu.memory_space<vmem>>, %arg3: memref<128x128xbf16, #tpu.memory_space<vmem>>, %arg4: memref<128x128xbf16, #tpu.memory_space<vmem>>, %arg5: memref<128x128xbf16, #tpu.memory_space<vmem>>, %arg6: memref<128x128xbf16, #tpu.memory_space<vmem>>, %arg7: memref<1x128xf32, #tpu.memory_space<vmem>>, %arg8: memref<128x128xbf16, #tpu.memory_space<vmem>>, %arg9: memref<128x128xbf16, #tpu.memory_space<vmem>>, %arg10: memref<128x128xbf16, #tpu.memory_space<vmem>>, %arg11: memref<128x128xf32, #tpu.memory_space<vmem>>) attributes {dimension_semantics = [#tpu.dimension_semantics<parallel>, #tpu.dimension_semantics<arbitrary>], iteration_bounds = array<i64: 1, 1>, scalar_prefetch = 0 : i64, scratch_operands = 1 : i64, tpu.core_type = #tpu.core_type<tc>, window_params = [{transform_indices = @transform_0, window_bounds = array<i64: 128, 128>}, {transform_indices = @transform_1, window_bounds = array<i64: 128, 128>}, {transform_indices = @transform_2, window_bounds = array<i64: 128, 128>}, {pipeline_mode = #tpu.pipeline_mode<synchronous>, transform_indices = @transform_3, window_bounds = array<i64: 128, 128>}, {pipeline_mode = #tpu.pipeline_mode<synchronous>, transform_indices = @transform_4, window_bounds = array<i64: 128, 128>}, {pipeline_mode = #tpu.pipeline_mode<synchronous>, transform_indices = @transform_5, window_bounds = array<i64: 1, 128>}, {pipeline_mode = #tpu.pipeline_mode<synchronous>, transform_indices = @transform_6, window_bounds = array<i64: 128, 128>}, {transform_indices = @transform_7, window_bounds = array<i64: 128, 128>}, {transform_indices = @transform_8, window_bounds = array<i64: 128, 128>}]} {
    %c0_i32 = arith.constant 0 : i32
    %0 = arith.cmpi eq, %arg1, %c0_i32 : i32
    %1 = arith.extui %0 : i1 to i32
    %c0_i32_0 = arith.constant 0 : i32
    %2 = arith.cmpi ne, %1, %c0_i32_0 : i32
    scf.if %2 {
      %cst_10 = arith.constant 0.000000e+00 : f32
      %12 = vector.broadcast %cst_10 : f32 to vector<128x128xf32>
      %c0_11 = arith.constant 0 : index
      %c0_12 = arith.constant 0 : index
      %13 = vector.load %arg11[%c0_11, %c0_12] : memref<128x128xf32, #tpu.memory_space<vmem>>, vector<128x128xf32>
      tpu.vector_store %arg11[%c0_11, %c0_12], %12 {strides = array<i32>} : memref<128x128xf32, #tpu.memory_space<vmem>>, vector<128x128xf32>,
    } else {
    }
    %c0 = arith.constant 0 : index
    %c0_1 = arith.constant 0 : index
    %3 = vector.load %arg11[%c0, %c0_1] : memref<128x128xf32, #tpu.memory_space<vmem>>, vector<128x128xf32>
    %c0_2 = arith.constant 0 : index
    %c0_3 = arith.constant 0 : index
    %4 = vector.load %arg2[%c0_2, %c0_3] : memref<128x128xbf16, #tpu.memory_space<vmem>>, vector<128x128xbf16>
    %c0_4 = arith.constant 0 : index
    %c0_5 = arith.constant 0 : index
    %5 = vector.load %arg3[%c0_4, %c0_5] : memref<128x128xbf16, #tpu.memory_space<vmem>>, vector<128x128xbf16>
    %cst = arith.constant dense<0.000000e+00> : vector<128x128xf32>
    %6 = tpu.matmul %4, %5, %cst {dimension_numbers = #tpu.dot_dimension_numbers<[1], [0], [0], [1], [0, 0, 1, 1], [], []>} : vector<128x128xbf16>, vector<128x128xbf16>, vector<128x128xf32> -> vector<128x128xf32>
    %7 = arith.addf %3, %6 : vector<128x128xf32>
    %c0_6 = arith.constant 0 : index
    %c0_7 = arith.constant 0 : index
    %8 = vector.load %arg11[%c0_6, %c0_7] : memref<128x128xf32, #tpu.memory_space<vmem>>, vector<128x128xf32>
    tpu.vector_store %arg11[%c0_6, %c0_7], %7 {strides = array<i32>} : memref<128x128xf32, #tpu.memory_space<vmem>>, vector<128x128xf32>,
    %c0_i32_8 = arith.constant 0 : i32
    %9 = arith.cmpi eq, %arg1, %c0_i32_8 : i32
    %10 = arith.extui %9 : i1 to i32
    %c0_i32_9 = arith.constant 0 : i32
    %11 = arith.cmpi ne, %10, %c0_i32_9 : i32
    scf.if %11 {
      %c0_10 = arith.constant 0 : index
      %c0_11 = arith.constant 0 : index
      %12 = vector.load %arg11[%c0_10, %c0_11] : memref<128x128xf32, #tpu.memory_space<vmem>>, vector<128x128xf32>
      %13 = arith.truncf %12 : vector<128x128xf32> to vector<128x128xbf16>
      %c0_12 = arith.constant 0 : index
      %c0_13 = arith.constant 0 : index
      %14 = vector.load %arg5[%c0_12, %c0_13] : memref<128x128xbf16, #tpu.memory_space<vmem>>, vector<128x128xbf16>
      %cst_14 = arith.constant dense<0.000000e+00> : vector<128x128xf32>
      %15 = tpu.matmul %13, %14, %cst_14 {dimension_numbers = #tpu.dot_dimension_numbers<[1], [0], [0], [1], [0, 0, 1, 1], [], []>} : vector<128x128xbf16>, vector<128x128xbf16>, vector<128x128xf32> -> vector<128x128xf32>
      %c0_15 = arith.constant 0 : index
      %c0_16 = arith.constant 0 : index
      %16 = vector.load %arg4[%c0_15, %c0_16] : memref<128x128xbf16, #tpu.memory_space<vmem>>, vector<128x128xbf16>
      %c0_17 = arith.constant 0 : index
      %c0_18 = arith.constant 0 : index
      %17 = vector.load %arg6[%c0_17, %c0_18] : memref<128x128xbf16, #tpu.memory_space<vmem>>, vector<128x128xbf16>
      %cst_19 = arith.constant dense<0.000000e+00> : vector<128x128xf32>
      %18 = tpu.matmul %16, %17, %cst_19 {dimension_numbers = #tpu.dot_dimension_numbers<[1], [0], [0], [1], [0, 0, 1, 1], [], []>} : vector<128x128xbf16>, vector<128x128xbf16>, vector<128x128xf32> -> vector<128x128xf32>
      %19 = arith.addf %15, %18 : vector<128x128xf32>
      %c0_20 = arith.constant 0 : index
      %c0_21 = arith.constant 0 : index
      %20 = vector.load %arg7[%c0_20, %c0_21] : memref<1x128xf32, #tpu.memory_space<vmem>>, vector<1x128xf32>
      %21 = vector.broadcast %20 : vector<1x128xf32> to vector<128x128xf32>
      %22 = arith.addf %19, %21 : vector<128x128xf32>
      %cst_22 = arith.constant 0.000000e+00 : f32
      %23 = vector.broadcast %cst_22 : f32 to vector<128x128xf32>
      %24 = arith.maximumf %22, %23 : vector<128x128xf32>
      %25 = arith.truncf %24 : vector<128x128xf32> to vector<128x128xbf16>
      %c0_23 = arith.constant 0 : index
      %c0_24 = arith.constant 0 : index
      %26 = vector.load %arg9[%c0_23, %c0_24] : memref<128x128xbf16, #tpu.memory_space<vmem>>, vector<128x128xbf16>
      tpu.vector_store %arg9[%c0_23, %c0_24], %25 {strides = array<i32>} : memref<128x128xbf16, #tpu.memory_space<vmem>>, vector<128x128xbf16>,
      %c0_25 = arith.constant 0 : index
      %c0_26 = arith.constant 0 : index
      %27 = vector.load %arg8[%c0_25, %c0_26] : memref<128x128xbf16, #tpu.memory_space<vmem>>, vector<128x128xbf16>
      %cst_27 = arith.constant dense<0.000000e+00> : vector<128x128xf32>
      %28 = tpu.matmul %25, %27, %cst_27 {dimension_numbers = #tpu.dot_dimension_numbers<[1], [0], [0], [1], [0, 0, 1, 1], [], []>} : vector<128x128xbf16>, vector<128x128xbf16>, vector<128x128xf32> -> vector<128x128xf32>
      %29 = arith.truncf %28 : vector<128x128xf32> to vector<128x128xbf16>
      %c0_28 = arith.constant 0 : index
      %c0_29 = arith.constant 0 : index
      %30 = vector.load %arg10[%c0_28, %c0_29] : memref<128x128xbf16, #tpu.memory_space<vmem>>, vector<128x128xbf16>
      tpu.vector_store %arg10[%c0_28, %c0_29], %29 {strides = array<i32>} : memref<128x128xbf16, #tpu.memory_space<vmem>>, vector<128x128xbf16>,
    } else {
    }
    return
  }
  func.func @transform_0(%arg0: i32, %arg1: i32) -> (i32, i32) {
    %c0_i32 = arith.constant 0 : i32
    return %arg0, %arg1 : i32, i32
  }
  func.func @transform_1(%arg0: i32, %arg1: i32) -> (i32, i32) {
    %c0_i32 = arith.constant 0 : i32
    %c0_i32_0 = arith.constant 0 : i32
    return %arg1, %c0_i32 : i32, i32
  }
  func.func @transform_2(%arg0: i32, %arg1: i32) -> (i32, i32) {
    %c0_i32 = arith.constant 0 : i32
    %c0_i32_0 = arith.constant 0 : i32
    return %arg0, %c0_i32 : i32, i32
  }
  func.func @transform_3(%arg0: i32, %arg1: i32) -> (i32, i32) {
    %c0_i32 = arith.constant 0 : i32
    %c0_i32_0 = arith.constant 0 : i32
    %c0_i32_1 = arith.constant 0 : i32
    return %c0_i32, %c0_i32_0 : i32, i32
  }
  func.func @transform_4(%arg0: i32, %arg1: i32) -> (i32, i32) {
    %c0_i32 = arith.constant 0 : i32
    %c0_i32_0 = arith.constant 0 : i32
    %c0_i32_1 = arith.constant 0 : i32
    return %c0_i32, %c0_i32_0 : i32, i32
  }
  func.func @transform_5(%arg0: i32, %arg1: i32) -> (i32, i32) {
    %c0_i32 = arith.constant 0 : i32
    %c0_i32_0 = arith.constant 0 : i32
    %c0_i32_1 = arith.constant 0 : i32
    return %c0_i32, %c0_i32_0 : i32, i32
  }
  func.func @transform_6(%arg0: i32, %arg1: i32) -> (i32, i32) {
    %c0_i32 = arith.constant 0 : i32
    %c0_i32_0 = arith.constant 0 : i32
    %c0_i32_1 = arith.constant 0 : i32
    return %c0_i32, %c0_i32_0 : i32, i32
  }
  func.func @transform_7(%arg0: i32, %arg1: i32) -> (i32, i32) {
    %c0_i32 = arith.constant 0 : i32
    %c0_i32_0 = arith.constant 0 : i32
    return %arg0, %c0_i32 : i32, i32
  }
  func.func @transform_8(%arg0: i32, %arg1: i32) -> (i32, i32) {
    %c0_i32 = arith.constant 0 : i32
    %c0_i32_0 = arith.constant 0 : i32
    return %arg0, %c0_i32 : i32, i32
  }
}

module attributes {stable_mosaic.version = 11 : i64} {
  func.func @_sage2_kernel(%arg0: i32, %arg1: i32, %arg2: memref<128x128xbf16, #tpu.memory_space<vmem>>, %arg3: memref<128x128xbf16, #tpu.memory_space<vmem>>, %arg4: memref<128x128xbf16, #tpu.memory_space<vmem>>, %arg5: memref<128x128xbf16, #tpu.memory_space<vmem>>, %arg6: memref<1x128xf32, #tpu.memory_space<vmem>>, %arg7: memref<128x128xf32, #tpu.memory_space<vmem>>, %arg8: memref<128x128xf32, #tpu.memory_space<vmem>>) attributes {dimension_semantics = [#tpu.dimension_semantics<parallel>, #tpu.dimension_semantics<arbitrary>], iteration_bounds = array<i64: 1, 1>, scalar_prefetch = 0 : i64, scratch_operands = 1 : i64, tpu.core_type = #tpu.core_type<tc>, window_params = [{transform_indices = @transform_0, window_bounds = array<i64: 128, 128>}, {transform_indices = @transform_1, window_bounds = array<i64: 128, 128>}, {transform_indices = @transform_2, window_bounds = array<i64: 128, 128>}, {pipeline_mode = #tpu.pipeline_mode<synchronous>, transform_indices = @transform_3, window_bounds = array<i64: 128, 128>}, {pipeline_mode = #tpu.pipeline_mode<synchronous>, transform_indices = @transform_4, window_bounds = array<i64: 1, 128>}, {transform_indices = @transform_5, window_bounds = array<i64: 128, 128>}]} {
    %c0_i32 = arith.constant 0 : i32
    %0 = arith.cmpi eq, %arg1, %c0_i32 : i32
    %1 = arith.extui %0 : i1 to i32
    %c0_i32_0 = arith.constant 0 : i32
    %2 = arith.cmpi ne, %1, %c0_i32_0 : i32
    scf.if %2 {
      %cst_10 = arith.constant 0.000000e+00 : f32
      %12 = vector.broadcast %cst_10 : f32 to vector<128x128xf32>
      %c0_11 = arith.constant 0 : index
      %c0_12 = arith.constant 0 : index
      %13 = vector.load %arg8[%c0_11, %c0_12] : memref<128x128xf32, #tpu.memory_space<vmem>>, vector<128x128xf32>
      tpu.vector_store %arg8[%c0_11, %c0_12], %12 {strides = array<i32>} : memref<128x128xf32, #tpu.memory_space<vmem>>, vector<128x128xf32>,
    } else {
    }
    %c0 = arith.constant 0 : index
    %c0_1 = arith.constant 0 : index
    %3 = vector.load %arg8[%c0, %c0_1] : memref<128x128xf32, #tpu.memory_space<vmem>>, vector<128x128xf32>
    %c0_2 = arith.constant 0 : index
    %c0_3 = arith.constant 0 : index
    %4 = vector.load %arg2[%c0_2, %c0_3] : memref<128x128xbf16, #tpu.memory_space<vmem>>, vector<128x128xbf16>
    %c0_4 = arith.constant 0 : index
    %c0_5 = arith.constant 0 : index
    %5 = vector.load %arg3[%c0_4, %c0_5] : memref<128x128xbf16, #tpu.memory_space<vmem>>, vector<128x128xbf16>
    %cst = arith.constant dense<0.000000e+00> : vector<128x128xf32>
    %6 = tpu.matmul %4, %5, %cst {dimension_numbers = #tpu.dot_dimension_numbers<[1], [0], [0], [1], [0, 0, 1, 1], [], []>} : vector<128x128xbf16>, vector<128x128xbf16>, vector<128x128xf32> -> vector<128x128xf32>
    %7 = arith.addf %3, %6 : vector<128x128xf32>
    %c0_6 = arith.constant 0 : index
    %c0_7 = arith.constant 0 : index
    %8 = vector.load %arg8[%c0_6, %c0_7] : memref<128x128xf32, #tpu.memory_space<vmem>>, vector<128x128xf32>
    tpu.vector_store %arg8[%c0_6, %c0_7], %7 {strides = array<i32>} : memref<128x128xf32, #tpu.memory_space<vmem>>, vector<128x128xf32>,
    %c0_i32_8 = arith.constant 0 : i32
    %9 = arith.cmpi eq, %arg1, %c0_i32_8 : i32
    %10 = arith.extui %9 : i1 to i32
    %c0_i32_9 = arith.constant 0 : i32
    %11 = arith.cmpi ne, %10, %c0_i32_9 : i32
    scf.if %11 {
      %c0_10 = arith.constant 0 : index
      %c0_11 = arith.constant 0 : index
      %12 = vector.load %arg8[%c0_10, %c0_11] : memref<128x128xf32, #tpu.memory_space<vmem>>, vector<128x128xf32>
      %c0_12 = arith.constant 0 : index
      %c0_13 = arith.constant 0 : index
      %13 = vector.load %arg4[%c0_12, %c0_13] : memref<128x128xbf16, #tpu.memory_space<vmem>>, vector<128x128xbf16>
      %c0_14 = arith.constant 0 : index
      %c0_15 = arith.constant 0 : index
      %14 = vector.load %arg5[%c0_14, %c0_15] : memref<128x128xbf16, #tpu.memory_space<vmem>>, vector<128x128xbf16>
      %cst_16 = arith.constant dense<0.000000e+00> : vector<128x128xf32>
      %15 = tpu.matmul %13, %14, %cst_16 {dimension_numbers = #tpu.dot_dimension_numbers<[1], [0], [0], [1], [0, 0, 1, 1], [], []>} : vector<128x128xbf16>, vector<128x128xbf16>, vector<128x128xf32> -> vector<128x128xf32>
      %16 = arith.addf %12, %15 : vector<128x128xf32>
      %c0_17 = arith.constant 0 : index
      %c0_18 = arith.constant 0 : index
      %17 = vector.load %arg6[%c0_17, %c0_18] : memref<1x128xf32, #tpu.memory_space<vmem>>, vector<1x128xf32>
      %18 = vector.broadcast %17 : vector<1x128xf32> to vector<128x128xf32>
      %19 = arith.addf %16, %18 : vector<128x128xf32>
      %20 = tpu.iota {dimensions = array<i32: 1>} : vector<128x128xi32>
      %c8_i32 = arith.constant 8 : i32
      %21 = vector.broadcast %c8_i32 : i32 to vector<128x128xi32>
      %22 = arith.cmpi slt, %20, %21 : vector<128x128xi32>
      %cst_19 = arith.constant 0xFF800000 : f32
      %23 = vector.broadcast %cst_19 : f32 to vector<128x128xf32>
      %24 = arith.select %22, %19, %23 : vector<128x128xi1>, vector<128x128xf32>
      %cst_20 = arith.constant dense<0xFF800000> : vector<128xf32>
      %25 = vector.multi_reduction <maximumf>, %24, %cst_20 [1] : vector<128x128xf32> to vector<128xf32>
      %26 = vector.shape_cast %25 : vector<128xf32> to vector<128x1xf32>
      %27 = vector.broadcast %26 : vector<128x1xf32> to vector<128x128xf32>
      %28 = arith.subf %19, %27 : vector<128x128xf32>
      %cst_21 = arith.constant 0xFF800000 : f32
      %29 = vector.broadcast %cst_21 : f32 to vector<128x128xf32>
      %30 = arith.select %22, %28, %29 : vector<128x128xi1>, vector<128x128xf32>
      %31 = math.exp %30 : vector<128x128xf32>
      %cst_22 = arith.constant dense<0.000000e+00> : vector<128xf32>
      %32 = vector.multi_reduction <add>, %31, %cst_22 [1] : vector<128x128xf32> to vector<128xf32>
      %33 = vector.shape_cast %32 : vector<128xf32> to vector<128x1xf32>
      %34 = math.log %33 : vector<128x1xf32>
      %35 = vector.broadcast %34 : vector<128x1xf32> to vector<128x128xf32>
      %36 = arith.subf %28, %35 : vector<128x128xf32>
      %c0_23 = arith.constant 0 : index
      %c0_24 = arith.constant 0 : index
      %37 = vector.load %arg7[%c0_23, %c0_24] : memref<128x128xf32, #tpu.memory_space<vmem>>, vector<128x128xf32>
      tpu.vector_store %arg7[%c0_23, %c0_24], %36 {strides = array<i32>} : memref<128x128xf32, #tpu.memory_space<vmem>>, vector<128x128xf32>,
    } else {
    }
    return
  }
  func.func @transform_0(%arg0: i32, %arg1: i32) -> (i32, i32) {
    %c0_i32 = arith.constant 0 : i32
    return %arg0, %arg1 : i32, i32
  }
  func.func @transform_1(%arg0: i32, %arg1: i32) -> (i32, i32) {
    %c0_i32 = arith.constant 0 : i32
    %c0_i32_0 = arith.constant 0 : i32
    return %arg1, %c0_i32 : i32, i32
  }
  func.func @transform_2(%arg0: i32, %arg1: i32) -> (i32, i32) {
    %c0_i32 = arith.constant 0 : i32
    %c0_i32_0 = arith.constant 0 : i32
    return %arg0, %c0_i32 : i32, i32
  }
  func.func @transform_3(%arg0: i32, %arg1: i32) -> (i32, i32) {
    %c0_i32 = arith.constant 0 : i32
    %c0_i32_0 = arith.constant 0 : i32
    %c0_i32_1 = arith.constant 0 : i32
    return %c0_i32, %c0_i32_0 : i32, i32
  }
  func.func @transform_4(%arg0: i32, %arg1: i32) -> (i32, i32) {
    %c0_i32 = arith.constant 0 : i32
    %c0_i32_0 = arith.constant 0 : i32
    %c0_i32_1 = arith.constant 0 : i32
    return %c0_i32, %c0_i32_0 : i32, i32
  }
  func.func @transform_5(%arg0: i32, %arg1: i32) -> (i32, i32) {
    %c0_i32 = arith.constant 0 : i32
    %c0_i32_0 = arith.constant 0 : i32
    return %arg0, %c0_i32 : i32, i32
  }
}

</mosaic_0001>

<llo_original>
// kernel: graphsage_forward.3
$region0: #{graphsage_forward.3}
  #allocation0 [shape = 'u32[]', space=smem, size = 0x4, offset = 0x4, fixed_abs, tag = 'smem constant byte address 0x4 - core index']
  #allocation1 [shape = 'u32[144,128]{1,0:T(1,128)}', space=vmem, size = 0x12000, scoped, tag = 'internal scratch']
  #allocation2 [shape = 'f32[128,128]{1,0:T(8,128)}', space=vmem, size = 0x10000, scoped, tag = 'scratch operand']
  %s0 = inlined_call_operand.vmem [shape: bf16[128,128], index: 0, kind: input, shape index: {}]
  %s1 = inlined_call_operand.vmem [shape: bf16[128,128], index: 1, kind: input, shape index: {}]
  %s2 = inlined_call_operand.vmem [shape: bf16[128,128], index: 2, kind: input, shape index: {}]
  %s3 = inlined_call_operand.vmem [shape: bf16[128,128], index: 3, kind: input, shape index: {}]
  %s4 = inlined_call_operand.vmem [shape: f32[1,128], index: 4, kind: input, shape index: {}]
  %s5 = inlined_call_operand.vmem [shape: f32[128,128], index: 5, kind: output, shape index: {}]
  %s6 = sld [smem:[#allocation0]]
  $region38: #{graphsage_forward.3} parent=0
    _
  %s8 = ssub.s32 1, %s6
  %s9 = scalar_select 0, %s8, %s6
  // Predicated region
  $region2: #{graphsage_forward.3} parent=0 // pred_check
    _
  $region3: #{graphsage_forward.3} parent=0 // pred_check_branch
    %11 = sbr.rel (0) target = $region5
  $region4: #{graphsage_forward.3} parent=0 // pred_region
    _
  $region5: #{graphsage_forward.3} parent=0 // pred_fallthru
    _
  // Predicated region
  $region6: #{graphsage_forward.3} parent=0 // pred_check
    _
  $region7: #{graphsage_forward.3} parent=0 // pred_check_branch
    %13 = sbr.rel (0) target = $region9
  $region8: #{graphsage_forward.3} parent=0 // pred_region
    _
  $region9: #{graphsage_forward.3} parent=0 // pred_fallthru
    _
  // Predicated region
  $region10: #{graphsage_forward.3} parent=0 // pred_check
    _
  $region11: #{graphsage_forward.3} parent=0 // pred_check_branch
    %15 = sbr.rel (0) target = $region13
  $region12: #{graphsage_forward.3} parent=0 // pred_region
    _
  $region13: #{graphsage_forward.3} parent=0 // pred_fallthru
    _
  // Predicated region
  $region14: #{graphsage_forward.3} parent=0 // pred_check
    _
  $region15: #{graphsage_forward.3} parent=0 // pred_check_branch
    %17 = sbr.rel (0) target = $region17
  $region16: #{graphsage_forward.3} parent=0 // pred_region
    _
  $region17: #{graphsage_forward.3} parent=0 // pred_fallthru
    _
  // Predicated region
  $region18: #{graphsage_forward.3} parent=0 // pred_check
    _
  $region19: #{graphsage_forward.3} parent=0 // pred_check_branch
    %19 = sbr.rel (0) target = $region21
  $region20: #{graphsage_forward.3} parent=0 // pred_region
    _
  $region21: #{graphsage_forward.3} parent=0 // pred_fallthru
    _
  %p21 = scmp.eq.s32.totalorder 0, 0
  // Predicated region
  $region22: #{graphsage_forward.3} parent=0 // pred_check
    %p22 = pneg %p21
  $region23: #{graphsage_forward.3} parent=0 // pred_check_branch
    %24 = sbr.rel (%p22) target = $region25
  $region24: #{graphsage_forward.3} parent=0 // pred_region
    %25 = vst [vmem:[#allocation2] sm:$0xff] 0.0
    %26 = vst [vmem:[#allocation2 + $0x8] sm:$0xff] 0.0
    %27 = vst [vmem:[#allocation2 + $0x10] sm:$0xff] 0.0
    %28 = vst [vmem:[#allocation2 + $0x18] sm:$0xff] 0.0
    %29 = vst [vmem:[#allocation2 + $0x20] sm:$0xff] 0.0
    %30 = vst [vmem:[#allocation2 + $0x28] sm:$0xff] 0.0
    %31 = vst [vmem:[#allocation2 + $0x30] sm:$0xff] 0.0
    %32 = vst [vmem:[#allocation2 + $0x38] sm:$0xff] 0.0
    %33 = vst [vmem:[#allocation2 + $0x40] sm:$0xff] 0.0
    %34 = vst [vmem:[#allocation2 + $0x48] sm:$0xff] 0.0
    %35 = vst [vmem:[#allocation2 + $0x50] sm:$0xff] 0.0
    %36 = vst [vmem:[#allocation2 + $0x58] sm:$0xff] 0.0
    %37 = vst [vmem:[#allocation2 + $0x60] sm:$0xff] 0.0
    %38 = vst [vmem:[#allocation2 + $0x68] sm:$0xff] 0.0
    %39 = vst [vmem:[#allocation2 + $0x70] sm:$0xff] 0.0
    %40 = vst [vmem:[#allocation2 + $0x78] sm:$0xff] 0.0
  $region25: #{graphsage_forward.3} parent=0 // pred_fallthru
    _
  %v41 = vld [vmem:[#allocation2] sm:$0xff]
  %v42 = vld [vmem:[#allocation2 + $0x8] sm:$0xff]
  %v43 = vld [vmem:[#allocation2 + $0x10] sm:$0xff]
  %v44 = vld [vmem:[#allocation2 + $0x18] sm:$0xff]
  %v45 = vld [vmem:[#allocation2 + $0x20] sm:$0xff]
  %v46 = vld [vmem:[#allocation2 + $0x28] sm:$0xff]
  %v47 = vld [vmem:[#allocation2 + $0x30] sm:$0xff]
  %v48 = vld [vmem:[#allocation2 + $0x38] sm:$0xff]
  %v49 = vld [vmem:[#allocation2 + $0x40] sm:$0xff]
  %v50 = vld [vmem:[#allocation2 + $0x48] sm:$0xff]
  %v51 = vld [vmem:[#allocation2 + $0x50] sm:$0xff]
  %v52 = vld [vmem:[#allocation2 + $0x58] sm:$0xff]
  %v53 = vld [vmem:[#allocation2 + $0x60] sm:$0xff]
  %v54 = vld [vmem:[#allocation2 + $0x68] sm:$0xff]
  %v55 = vld [vmem:[#allocation2 + $0x70] sm:$0xff]
  %v56 = vld [vmem:[#allocation2 + $0x78] sm:$0xff]
  %v57 = vld [vmem:[%s0] sm:$0xf]
  %v58 = vld [vmem:[%s0 + $0x4] sm:$0xf]
  %v59 = vld [vmem:[%s0 + $0x8] sm:$0xf]
  %v60 = vld [vmem:[%s0 + $0xc] sm:$0xf]
  %v61 = vld [vmem:[%s0 + $0x10] sm:$0xf]
  %v62 = vld [vmem:[%s0 + $0x14] sm:$0xf]
  %v63 = vld [vmem:[%s0 + $0x18] sm:$0xf]
  %v64 = vld [vmem:[%s0 + $0x1c] sm:$0xf]
  %v65 = vld [vmem:[%s0 + $0x20] sm:$0xf]
  %v66 = vld [vmem:[%s0 + $0x24] sm:$0xf]
  %v67 = vld [vmem:[%s0 + $0x28] sm:$0xf]
  %v68 = vld [vmem:[%s0 + $0x2c] sm:$0xf]
  %v69 = vld [vmem:[%s0 + $0x30] sm:$0xf]
  %v70 = vld [vmem:[%s0 + $0x34] sm:$0xf]
  %v71 = vld [vmem:[%s0 + $0x38] sm:$0xf]
  %v72 = vld [vmem:[%s0 + $0x3c] sm:$0xf]
  %v73 = vld [vmem:[%s1] sm:$0xf]
  %v74 = vld [vmem:[%s1 + $0x4] sm:$0xf]
  %v75 = vld [vmem:[%s1 + $0x8] sm:$0xf]
  %v76 = vld [vmem:[%s1 + $0xc] sm:$0xf]
  %v77 = vld [vmem:[%s1 + $0x10] sm:$0xf]
  %v78 = vld [vmem:[%s1 + $0x14] sm:$0xf]
  %v79 = vld [vmem:[%s1 + $0x18] sm:$0xf]
  %v80 = vld [vmem:[%s1 + $0x1c] sm:$0xf]
  %v81 = vld [vmem:[%s1 + $0x20] sm:$0xf]
  %v82 = vld [vmem:[%s1 + $0x24] sm:$0xf]
  %v83 = vld [vmem:[%s1 + $0x28] sm:$0xf]
  %v84 = vld [vmem:[%s1 + $0x2c] sm:$0xf]
  %v85 = vld [vmem:[%s1 + $0x30] sm:$0xf]
  %v86 = vld [vmem:[%s1 + $0x34] sm:$0xf]
  %v87 = vld [vmem:[%s1 + $0x38] sm:$0xf]
  %v88 = vld [vmem:[%s1 + $0x3c] sm:$0xf]
  %v105 = vunpack.c.l.b16 %v57
  %v106 = vunpack.c.l.b16 %v58
  %v107 = vunpack.c.l.b16 %v59
  %v108 = vunpack.c.l.b16 %v60
  %v109 = vunpack.c.l.b16 %v61
  %v110 = vunpack.c.l.b16 %v62
  %v111 = vunpack.c.l.b16 %v63
  %v112 = vunpack.c.l.b16 %v64
  %v113 = vunpack.c.l.b16 %v65
  %v114 = vunpack.c.l.b16 %v66
  %v115 = vunpack.c.l.b16 %v67
  %v116 = vunpack.c.l.b16 %v68
  %v117 = vunpack.c.l.b16 %v69
  %v118 = vunpack.c.l.b16 %v70
  %v119 = vunpack.c.l.b16 %v71
  %v120 = vunpack.c.l.b16 %v72
  %v121 = vpack.c.b16 %v106, %v105
  %v122 = vpack.c.b16 %v108, %v107
  %v123 = vpack.c.b16 %v110, %v109
  %v124 = vpack.c.b16 %v112, %v111
  %v125 = vpack.c.b16 %v114, %v113
  %v126 = vpack.c.b16 %v116, %v115
  %v127 = vpack.c.b16 %v118, %v117
  %v128 = vpack.c.b16 %v120, %v119
  %v153 = vunpack.c.l.b16 %v73
  %v154 = vunpack.c.l.b16 %v74
  %v155 = vunpack.c.l.b16 %v75
  %v156 = vunpack.c.l.b16 %v76
  %v157 = vunpack.c.l.b16 %v77
  %v158 = vunpack.c.l.b16 %v78
  %v159 = vunpack.c.l.b16 %v79
  %v160 = vunpack.c.l.b16 %v80
  %v161 = vunpack.c.l.b16 %v81
  %v162 = vunpack.c.l.b16 %v82
  %v163 = vunpack.c.l.b16 %v83
  %v164 = vunpack.c.l.b16 %v84
  %v165 = vunpack.c.l.b16 %v85
  %v166 = vunpack.c.l.b16 %v86
  %v167 = vunpack.c.l.b16 %v87
  %v168 = vunpack.c.l.b16 %v88
  %v169 = vpack.c.b16 %v154, %v153
  %v170 = vpack.c.b16 %v156, %v155
  %v171 = vpack.c.b16 %v158, %v157
  %v172 = vpack.c.b16 %v160, %v159
  %v173 = vpack.c.b16 %v162, %v161
  %v174 = vpack.c.b16 %v164, %v163
  %v175 = vpack.c.b16 %v166, %v165
  %v176 = vpack.c.b16 %v168, %v167
  %185 = vmatprep.subr.bf16.mxu0 0
  %186 = vmatpush1.bf16.msra.mxu0 %v176
  %187 = vmatprep.subr.bf16.mxu0 0
  %188 = vmatpush1.bf16.msra.mxu0 %v175
  %189 = vmatprep.subr.bf16.mxu0 0
  %190 = vmatpush1.bf16.msra.mxu0 %v174
  %191 = vmatprep.subr.bf16.mxu0 0
  %192 = vmatpush1.bf16.msra.mxu0 %v173
  %193 = vmatprep.subr.bf16.mxu0 0
  %194 = vmatpush1.bf16.msra.mxu0 %v172
  %195 = vmatprep.subr.bf16.mxu0 0
  %196 = vmatpush1.bf16.msra.mxu0 %v171
  %197 = vmatprep.subr.bf16.mxu0 0
  %198 = vmatpush1.bf16.msra.mxu0 %v170
  %199 = vmatprep.subr.bf16.mxu0 0
  %200 = vmatpush1.bf16.msra.mxu0 %v169
  %201 = vmatprep.subr.bf16.mxu0 0
  %202 = vmatpush2.bf16.msra.mxu0 0
  %203 = vmatprep.subr.bf16.mxu0 0
  %204 = vmatpush2.bf16.msra.mxu0 0
  %205 = vmatprep.subr.bf16.mxu0 0
  %206 = vmatpush2.bf16.msra.mxu0 0
  %207 = vmatprep.subr.bf16.mxu0 0
  %208 = vmatpush2.bf16.msra.mxu0 0
  %209 = vmatprep.subr.bf16.mxu0 0
  %210 = vmatpush2.bf16.msra.mxu0 0
  %211 = vmatprep.subr.bf16.mxu0 0
  %212 = vmatpush2.bf16.msra.mxu0 0
  %213 = vmatprep.subr.bf16.mxu0 0
  %214 = vmatpush2.bf16.msra.mxu0 0
  %215 = vmatprep.subr.bf16.mxu0 0
  %216 = vmatpush2.bf16.msra.mxu0 0
  %217 = vmatprep.mubr.bf16.mxu0 0
  %218 = vmatmul.mubr.bf16.gmra.mxu0 %v121
  %v219 = vpop.f32.mrf.mxu0
  %v220 = vadd.f32 0.0, %v219
  %v221 = vpop.f32.mrf.mxu0
  %v222 = vpop.f32.mrf.mxu0
  %v223 = vadd.f32 0.0, %v222
  %v224 = vpop.f32.mrf.mxu0
  %225 = vmatprep.mubr.bf16.mxu0 0
  %226 = vmatmul.mubr.bf16.gmra.mxu0 %v122
  %v227 = vpop.f32.mrf.mxu0
  %v228 = vadd.f32 0.0, %v227
  %v229 = vpop.f32.mrf.mxu0
  %v230 = vpop.f32.mrf.mxu0
  %v231 = vadd.f32 0.0, %v230
  %v232 = vpop.f32.mrf.mxu0
  %233 = vmatprep.mubr.bf16.mxu0 0
  %234 = vmatmul.mubr.bf16.gmra.mxu0 %v123
  %v235 = vpop.f32.mrf.mxu0
  %v236 = vadd.f32 0.0, %v235
  %v237 = vpop.f32.mrf.mxu0
  %v238 = vpop.f32.mrf.mxu0
  %v239 = vadd.f32 0.0, %v238
  %v240 = vpop.f32.mrf.mxu0
  %241 = vmatprep.mubr.bf16.mxu0 0
  %242 = vmatmul.mubr.bf16.gmra.mxu0 %v124
  %v243 = vpop.f32.mrf.mxu0
  %v244 = vadd.f32 0.0, %v243
  %v245 = vpop.f32.mrf.mxu0
  %v246 = vpop.f32.mrf.mxu0
  %v247 = vadd.f32 0.0, %v246
  %v248 = vpop.f32.mrf.mxu0
  %249 = vmatprep.mubr.bf16.mxu0 0
  %250 = vmatmul.mubr.bf16.gmra.mxu0 %v125
  %v251 = vpop.f32.mrf.mxu0
  %v252 = vadd.f32 0.0, %v251
  %v253 = vpop.f32.mrf.mxu0
  %v254 = vpop.f32.mrf.mxu0
  %v255 = vadd.f32 0.0, %v254
  %v256 = vpop.f32.mrf.mxu0
  %257 = vmatprep.mubr.bf16.mxu0 0
  %258 = vmatmul.mubr.bf16.gmra.mxu0 %v126
  %v259 = vpop.f32.mrf.mxu0
  %v260 = vadd.f32 0.0, %v259
  %v261 = vpop.f32.mrf.mxu0
  %v262 = vpop.f32.mrf.mxu0
  %v263 = vadd.f32 0.0, %v262
  %v264 = vpop.f32.mrf.mxu0
  %265 = vmatprep.mubr.bf16.mxu0 0
  %266 = vmatmul.mubr.bf16.gmra.mxu0 %v127
  %v267 = vpop.f32.mrf.mxu0
  %v268 = vadd.f32 0.0, %v267
  %v269 = vpop.f32.mrf.mxu0
  %v270 = vpop.f32.mrf.mxu0
  %v271 = vadd.f32 0.0, %v270
  %v272 = vpop.f32.mrf.mxu0
  %273 = vmatprep.mubr.bf16.mxu0 0
  %274 = vmatmul.mubr.bf16.gmra.mxu0 %v128
  %v275 = vpop.f32.mrf.mxu0
  %v276 = vadd.f32 0.0, %v275
  %v277 = vpop.f32.mrf.mxu0
  %v278 = vpop.f32.mrf.mxu0
  %v279 = vadd.f32 0.0, %v278
  %v280 = vpop.f32.mrf.mxu0
  %281 = vdwg.mxu0
  %v282 = vadd.f32 %v41, %v220
  %v283 = vadd.f32 %v42, %v223
  %v284 = vadd.f32 %v43, %v228
  %v285 = vadd.f32 %v44, %v231
  %v286 = vadd.f32 %v45, %v236
  %v287 = vadd.f32 %v46, %v239
  %v288 = vadd.f32 %v47, %v244
  %v289 = vadd.f32 %v48, %v247
  %v290 = vadd.f32 %v49, %v252
  %v291 = vadd.f32 %v50, %v255
  %v292 = vadd.f32 %v51, %v260
  %v293 = vadd.f32 %v52, %v263
  %v294 = vadd.f32 %v53, %v268
  %v295 = vadd.f32 %v54, %v271
  %v296 = vadd.f32 %v55, %v276
  %v297 = vadd.f32 %v56, %v279
  %298 = vst [vmem:[#allocation2] sm:$0xff] %v282
  %299 = vst [vmem:[#allocation2 + $0x8] sm:$0xff] %v283
  %300 = vst [vmem:[#allocation2 + $0x10] sm:$0xff] %v284
  %301 = vst [vmem:[#allocation2 + $0x18] sm:$0xff] %v285
  %302 = vst [vmem:[#allocation2 + $0x20] sm:$0xff] %v286
  %303 = vst [vmem:[#allocation2 + $0x28] sm:$0xff] %v287
  %304 = vst [vmem:[#allocation2 + $0x30] sm:$0xff] %v288
  %305 = vst [vmem:[#allocation2 + $0x38] sm:$0xff] %v289
  %306 = vst [vmem:[#allocation2 + $0x40] sm:$0xff] %v290
  %307 = vst [vmem:[#allocation2 + $0x48] sm:$0xff] %v291
  %308 = vst [vmem:[#allocation2 + $0x50] sm:$0xff] %v292
  %309 = vst [vmem:[#allocation2 + $0x58] sm:$0xff] %v293
  %310 = vst [vmem:[#allocation2 + $0x60] sm:$0xff] %v294
  %311 = vst [vmem:[#allocation2 + $0x68] sm:$0xff] %v295
  %312 = vst [vmem:[#allocation2 + $0x70] sm:$0xff] %v296
  %313 = vst [vmem:[#allocation2 + $0x78] sm:$0xff] %v297
  // Predicated region
  $region26: #{graphsage_forward.3} parent=0 // pred_check
    %p314 = pneg %p21
  $region27: #{graphsage_forward.3} parent=0 // pred_check_branch
    %316 = sbr.rel (%p314) target = $region29
  $region28: #{graphsage_forward.3} parent=0 // pred_region
    %v317 = vld [vmem:[#allocation2] sm:$0xff]
    %v318 = vld [vmem:[#allocation2 + $0x8] sm:$0xff]
    %v319 = vld [vmem:[#allocation2 + $0x10] sm:$0xff]
    %v320 = vld [vmem:[#allocation2 + $0x18] sm:$0xff]
    %v321 = vld [vmem:[#allocation2 + $0x20] sm:$0xff]
    %v322 = vld [vmem:[#allocation2 + $0x28] sm:$0xff]
    %v323 = vld [vmem:[#allocation2 + $0x30] sm:$0xff]
    %v324 = vld [vmem:[#allocation2 + $0x38] sm:$0xff]
    %v325 = vld [vmem:[#allocation2 + $0x40] sm:$0xff]
    %v326 = vld [vmem:[#allocation2 + $0x48] sm:$0xff]
    %v327 = vld [vmem:[#allocation2 + $0x50] sm:$0xff]
    %v328 = vld [vmem:[#allocation2 + $0x58] sm:$0xff]
    %v329 = vld [vmem:[#allocation2 + $0x60] sm:$0xff]
    %v330 = vld [vmem:[#allocation2 + $0x68] sm:$0xff]
    %v331 = vld [vmem:[#allocation2 + $0x70] sm:$0xff]
    %v332 = vld [vmem:[#allocation2 + $0x78] sm:$0xff]
    %v333 = vld [vmem:[%s2] sm:$0xf]
    %v334 = vld [vmem:[%s2 + $0x4] sm:$0xf]
    %v335 = vld [vmem:[%s2 + $0x8] sm:$0xf]
    %v336 = vld [vmem:[%s2 + $0xc] sm:$0xf]
    %v337 = vld [vmem:[%s2 + $0x10] sm:$0xf]
    %v338 = vld [vmem:[%s2 + $0x14] sm:$0xf]
    %v339 = vld [vmem:[%s2 + $0x18] sm:$0xf]
    %v340 = vld [vmem:[%s2 + $0x1c] sm:$0xf]
    %v341 = vld [vmem:[%s2 + $0x20] sm:$0xf]
    %v342 = vld [vmem:[%s2 + $0x24] sm:$0xf]
    %v343 = vld [vmem:[%s2 + $0x28] sm:$0xf]
    %v344 = vld [vmem:[%s2 + $0x2c] sm:$0xf]
    %v345 = vld [vmem:[%s2 + $0x30] sm:$0xf]
    %v346 = vld [vmem:[%s2 + $0x34] sm:$0xf]
    %v347 = vld [vmem:[%s2 + $0x38] sm:$0xf]
    %v348 = vld [vmem:[%s2 + $0x3c] sm:$0xf]
    %v349 = vld [vmem:[%s3] sm:$0xf]
    %v350 = vld [vmem:[%s3 + $0x4] sm:$0xf]
    %v351 = vld [vmem:[%s3 + $0x8] sm:$0xf]
    %v352 = vld [vmem:[%s3 + $0xc] sm:$0xf]
    %v353 = vld [vmem:[%s3 + $0x10] sm:$0xf]
    %v354 = vld [vmem:[%s3 + $0x14] sm:$0xf]
    %v355 = vld [vmem:[%s3 + $0x18] sm:$0xf]
    %v356 = vld [vmem:[%s3 + $0x1c] sm:$0xf]
    %v357 = vld [vmem:[%s3 + $0x20] sm:$0xf]
    %v358 = vld [vmem:[%s3 + $0x24] sm:$0xf]
    %v359 = vld [vmem:[%s3 + $0x28] sm:$0xf]
    %v360 = vld [vmem:[%s3 + $0x2c] sm:$0xf]
    %v361 = vld [vmem:[%s3 + $0x30] sm:$0xf]
    %v362 = vld [vmem:[%s3 + $0x34] sm:$0xf]
    %v363 = vld [vmem:[%s3 + $0x38] sm:$0xf]
    %v364 = vld [vmem:[%s3 + $0x3c] sm:$0xf]
    %v381 = vunpack.c.l.b16 %v333
    %v382 = vunpack.c.l.b16 %v334
    %v383 = vunpack.c.l.b16 %v335
    %v384 = vunpack.c.l.b16 %v336
    %v385 = vunpack.c.l.b16 %v337
    %v386 = vunpack.c.l.b16 %v338
    %v387 = vunpack.c.l.b16 %v339
    %v388 = vunpack.c.l.b16 %v340
    %v389 = vunpack.c.l.b16 %v341
    %v390 = vunpack.c.l.b16 %v342
    %v391 = vunpack.c.l.b16 %v343
    %v392 = vunpack.c.l.b16 %v344
    %v393 = vunpack.c.l.b16 %v345
    %v394 = vunpack.c.l.b16 %v346
    %v395 = vunpack.c.l.b16 %v347
    %v396 = vunpack.c.l.b16 %v348
    %v397 = vpack.c.b16 %v382, %v381
    %v398 = vpack.c.b16 %v384, %v383
    %v399 = vpack.c.b16 %v386, %v385
    %v400 = vpack.c.b16 %v388, %v387
    %v401 = vpack.c.b16 %v390, %v389
    %v402 = vpack.c.b16 %v392, %v391
    %v403 = vpack.c.b16 %v394, %v393
    %v404 = vpack.c.b16 %v396, %v395
    %v429 = vunpack.c.l.b16 %v349
    %v430 = vunpack.c.l.b16 %v350
    %v431 = vunpack.c.l.b16 %v351
    %v432 = vunpack.c.l.b16 %v352
    %v433 = vunpack.c.l.b16 %v353
    %v434 = vunpack.c.l.b16 %v354
    %v435 = vunpack.c.l.b16 %v355
    %v436 = vunpack.c.l.b16 %v356
    %v437 = vunpack.c.l.b16 %v357
    %v438 = vunpack.c.l.b16 %v358
    %v439 = vunpack.c.l.b16 %v359
    %v440 = vunpack.c.l.b16 %v360
    %v441 = vunpack.c.l.b16 %v361
    %v442 = vunpack.c.l.b16 %v362
    %v443 = vunpack.c.l.b16 %v363
    %v444 = vunpack.c.l.b16 %v364
    %v445 = vpack.c.b16 %v430, %v429
    %v446 = vpack.c.b16 %v432, %v431
    %v447 = vpack.c.b16 %v434, %v433
    %v448 = vpack.c.b16 %v436, %v435
    %v449 = vpack.c.b16 %v438, %v437
    %v450 = vpack.c.b16 %v440, %v439
    %v451 = vpack.c.b16 %v442, %v441
    %v452 = vpack.c.b16 %v444, %v443
    %461 = vmatprep.subr.bf16.mxu0 0
    %462 = vmatpush1.bf16.msra.mxu0 %v452
    %463 = vmatprep.subr.bf16.mxu0 0
    %464 = vmatpush1.bf16.msra.mxu0 %v451
    %465 = vmatprep.subr.bf16.mxu0 0
    %466 = vmatpush1.bf16.msra.mxu0 %v450
    %467 = vmatprep.subr.bf16.mxu0 0
    %468 = vmatpush1.bf16.msra.mxu0 %v449
    %469 = vmatprep.subr.bf16.mxu0 0
    %470 = vmatpush1.bf16.msra.mxu0 %v448
    %471 = vmatprep.subr.bf16.mxu0 0
    %472 = vmatpush1.bf16.msra.mxu0 %v447
    %473 = vmatprep.subr.bf16.mxu0 0
    %474 = vmatpush1.bf16.msra.mxu0 %v446
    %475 = vmatprep.subr.bf16.mxu0 0
    %476 = vmatpush1.bf16.msra.mxu0 %v445
    %477 = vmatprep.subr.bf16.mxu0 0
    %478 = vmatpush2.bf16.msra.mxu0 0
    %479 = vmatprep.subr.bf16.mxu0 0
    %480 = vmatpush2.bf16.msra.mxu0 0
    %481 = vmatprep.subr.bf16.mxu0 0
    %482 = vmatpush2.bf16.msra.mxu0 0
    %483 = vmatprep.subr.bf16.mxu0 0
    %484 = vmatpush2.bf16.msra.mxu0 0
    %485 = vmatprep.subr.bf16.mxu0 0
    %486 = vmatpush2.bf16.msra.mxu0 0
    %487 = vmatprep.subr.bf16.mxu0 0
    %488 = vmatpush2.bf16.msra.mxu0 0
    %489 = vmatprep.subr.bf16.mxu0 0
    %490 = vmatpush2.bf16.msra.mxu0 0
    %491 = vmatprep.subr.bf16.mxu0 0
    %492 = vmatpush2.bf16.msra.mxu0 0
    %493 = vmatprep.mubr.bf16.mxu0 0
    %494 = vmatmul.mubr.bf16.gmra.mxu0 %v397
    %v495 = vpop.f32.mrf.mxu0
    %v496 = vadd.f32 0.0, %v495
    %v497 = vpop.f32.mrf.mxu0
    %v498 = vpop.f32.mrf.mxu0
    %v499 = vadd.f32 0.0, %v498
    %v500 = vpop.f32.mrf.mxu0
    %501 = vmatprep.mubr.bf16.mxu0 0
    %502 = vmatmul.mubr.bf16.gmra.mxu0 %v398
    %v503 = vpop.f32.mrf.mxu0
    %v504 = vadd.f32 0.0, %v503
    %v505 = vpop.f32.mrf.mxu0
    %v506 = vpop.f32.mrf.mxu0
    %v507 = vadd.f32 0.0, %v506
    %v508 = vpop.f32.mrf.mxu0
    %509 = vmatprep.mubr.bf16.mxu0 0
    %510 = vmatmul.mubr.bf16.gmra.mxu0 %v399
    %v511 = vpop.f32.mrf.mxu0
    %v512 = vadd.f32 0.0, %v511
    %v513 = vpop.f32.mrf.mxu0
    %v514 = vpop.f32.mrf.mxu0
    %v515 = vadd.f32 0.0, %v514
    %v516 = vpop.f32.mrf.mxu0
    %517 = vmatprep.mubr.bf16.mxu0 0
    %518 = vmatmul.mubr.bf16.gmra.mxu0 %v400
    %v519 = vpop.f32.mrf.mxu0
    %v520 = vadd.f32 0.0, %v519
    %v521 = vpop.f32.mrf.mxu0
    %v522 = vpop.f32.mrf.mxu0
    %v523 = vadd.f32 0.0, %v522
    %v524 = vpop.f32.mrf.mxu0
    %525 = vmatprep.mubr.bf16.mxu0 0
    %526 = vmatmul.mubr.bf16.gmra.mxu0 %v401
    %v527 = vpop.f32.mrf.mxu0
    %v528 = vadd.f32 0.0, %v527
    %v529 = vpop.f32.mrf.mxu0
    %v530 = vpop.f32.mrf.mxu0
    %v531 = vadd.f32 0.0, %v530
    %v532 = vpop.f32.mrf.mxu0
    %533 = vmatprep.mubr.bf16.mxu0 0
    %534 = vmatmul.mubr.bf16.gmra.mxu0 %v402
    %v535 = vpop.f32.mrf.mxu0
    %v536 = vadd.f32 0.0, %v535
    %v537 = vpop.f32.mrf.mxu0
    %v538 = vpop.f32.mrf.mxu0
    %v539 = vadd.f32 0.0, %v538
    %v540 = vpop.f32.mrf.mxu0
    %541 = vmatprep.mubr.bf16.mxu0 0
    %542 = vmatmul.mubr.bf16.gmra.mxu0 %v403
    %v543 = vpop.f32.mrf.mxu0
    %v544 = vadd.f32 0.0, %v543
    %v545 = vpop.f32.mrf.mxu0
    %v546 = vpop.f32.mrf.mxu0
    %v547 = vadd.f32 0.0, %v546
    %v548 = vpop.f32.mrf.mxu0
    %549 = vmatprep.mubr.bf16.mxu0 0
    %550 = vmatmul.mubr.bf16.gmra.mxu0 %v404
    %v551 = vpop.f32.mrf.mxu0
    %v552 = vadd.f32 0.0, %v551
    %v553 = vpop.f32.mrf.mxu0
    %v554 = vpop.f32.mrf.mxu0
    %v555 = vadd.f32 0.0, %v554
    %v556 = vpop.f32.mrf.mxu0
    %557 = vdwg.mxu0
    %v558 = vadd.f32 %v317, %v496
    %v559 = vadd.f32 %v318, %v499
    %v560 = vadd.f32 %v319, %v504
    %v561 = vadd.f32 %v320, %v507
    %v562 = vadd.f32 %v321, %v512
    %v563 = vadd.f32 %v322, %v515
    %v564 = vadd.f32 %v323, %v520
    %v565 = vadd.f32 %v324, %v523
    %v566 = vadd.f32 %v325, %v528
    %v567 = vadd.f32 %v326, %v531
    %v568 = vadd.f32 %v327, %v536
    %v569 = vadd.f32 %v328, %v539
    %v570 = vadd.f32 %v329, %v544
    %v571 = vadd.f32 %v330, %v547
    %v572 = vadd.f32 %v331, %v552
    %v573 = vadd.f32 %v332, %v555
    %v574 = vld [vmem:[%s4] sm:$0x1]
    %v576 = vlaneseq
    %v577 = vshrl.u32 %v576, 7
    %v578 = vsub.s32 0, %v577
    %v579 = vrot.slane %v574, %v578
    %v581 = vadd.f32 %v558, %v579
    %v582 = vadd.f32 %v559, %v579
    %v583 = vadd.f32 %v560, %v579
    %v584 = vadd.f32 %v561, %v579
    %v585 = vadd.f32 %v562, %v579
    %v586 = vadd.f32 %v563, %v579
    %v587 = vadd.f32 %v564, %v579
    %v588 = vadd.f32 %v565, %v579
    %v589 = vadd.f32 %v566, %v579
    %v590 = vadd.f32 %v567, %v579
    %v591 = vadd.f32 %v568, %v579
    %v592 = vadd.f32 %v569, %v579
    %v593 = vadd.f32 %v570, %v579
    %v594 = vadd.f32 %v571, %v579
    %v595 = vadd.f32 %v572, %v579
    %v596 = vadd.f32 %v573, %v579
    %v597 = vlaneseq
    %v598 = vand.u32 %v597, 127
    %vm599 = vcmp.lt.s32.totalorder %v598, 8
    %v600 = vsel %vm599, %v581, -inf
    %v601 = vsel %vm599, %v582, -inf
    %v602 = vsel %vm599, %v583, -inf
    %v603 = vsel %vm599, %v584, -inf
    %v604 = vsel %vm599, %v585, -inf
    %v605 = vsel %vm599, %v586, -inf
    %v606 = vsel %vm599, %v587, -inf
    %v607 = vsel %vm599, %v588, -inf
    %v608 = vsel %vm599, %v589, -inf
    %v609 = vsel %vm599, %v590, -inf
    %v610 = vsel %vm599, %v591, -inf
    %v611 = vsel %vm599, %v592, -inf
    %v612 = vsel %vm599, %v593, -inf
    %v613 = vsel %vm599, %v594, -inf
    %v614 = vsel %vm599, %v595, -inf
    %v615 = vsel %vm599, %v596, -inf
    %616 = vmax.xlane.f32.xlu0 %v600
    %v617 = vpop.xlane.xlu0 %616
    %618 = vmax.xlane.f32.xlu0 %v601
    %v619 = vpop.xlane.xlu0 %618
    %620 = vmax.xlane.f32.xlu0 %v602
    %v621 = vpop.xlane.xlu0 %620
    %622 = vmax.xlane.f32.xlu0 %v603
    %v623 = vpop.xlane.xlu0 %622
    %624 = vmax.xlane.f32.xlu0 %v604
    %v625 = vpop.xlane.xlu0 %624
    %626 = vmax.xlane.f32.xlu0 %v605
    %v627 = vpop.xlane.xlu0 %626
    %628 = vmax.xlane.f32.xlu0 %v606
    %v629 = vpop.xlane.xlu0 %628
    %630 = vmax.xlane.f32.xlu0 %v607
    %v631 = vpop.xlane.xlu0 %630
    %632 = vmax.xlane.f32.xlu0 %v608
    %v633 = vpop.xlane.xlu0 %632
    %634 = vmax.xlane.f32.xlu0 %v609
    %v635 = vpop.xlane.xlu0 %634
    %636 = vmax.xlane.f32.xlu0 %v610
    %v637 = vpop.xlane.xlu0 %636
    %638 = vmax.xlane.f32.xlu0 %v611
    %v639 = vpop.xlane.xlu0 %638
    %640 = vmax.xlane.f32.xlu0 %v612
    %v641 = vpop.xlane.xlu0 %640
    %642 = vmax.xlane.f32.xlu0 %v613
    %v643 = vpop.xlane.xlu0 %642
    %644 = vmax.xlane.f32.xlu0 %v614
    %v645 = vpop.xlane.xlu0 %644
    %646 = vmax.xlane.f32.xlu0 %v615
    %v647 = vpop.xlane.xlu0 %646
    %v648 = vsub.f32 %v581, %v617
    %v649 = vsub.f32 %v582, %v619
    %v650 = vsub.f32 %v583, %v621
    %v651 = vsub.f32 %v584, %v623
    %v652 = vsub.f32 %v585, %v625
    %v653 = vsub.f32 %v586, %v627
    %v654 = vsub.f32 %v587, %v629
    %v655 = vsub.f32 %v588, %v631
    %v656 = vsub.f32 %v589, %v633
    %v657 = vsub.f32 %v590, %v635
    %v658 = vsub.f32 %v591, %v637
    %v659 = vsub.f32 %v592, %v639
    %v660 = vsub.f32 %v593, %v641
    %v661 = vsub.f32 %v594, %v643
    %v662 = vsub.f32 %v595, %v645
    %v663 = vsub.f32 %v596, %v647
    %v664 = vsel %vm599, %v648, -inf
    %v665 = vsel %vm599, %v649, -inf
    %v666 = vsel %vm599, %v650, -inf
    %v667 = vsel %vm599, %v651, -inf
    %v668 = vsel %vm599, %v652, -inf
    %v669 = vsel %vm599, %v653, -inf
    %v670 = vsel %vm599, %v654, -inf
    %v671 = vsel %vm599, %v655, -inf
    %v672 = vsel %vm599, %v656, -inf
    %v673 = vsel %vm599, %v657, -inf
    %v674 = vsel %vm599, %v658, -inf
    %v675 = vsel %vm599, %v659, -inf
    %v676 = vsel %vm599, %v660, -inf
    %v677 = vsel %vm599, %v661, -inf
    %v678 = vsel %vm599, %v662, -inf
    %v679 = vsel %vm599, %v663, -inf
    %v680 = vmul.f32 %v664, 1.442695
    %v681 = vpow.pop %v680
    %v682 = vmul.f32 %v665, 1.442695
    %v683 = vpow.pop %v682
    %v684 = vmul.f32 %v666, 1.442695
    %v685 = vpow.pop %v684
    %v686 = vmul.f32 %v667, 1.442695
    %v687 = vpow.pop %v686
    %v688 = vmul.f32 %v668, 1.442695
    %v689 = vpow.pop %v688
    %v690 = vmul.f32 %v669, 1.442695
    %v691 = vpow.pop %v690
    %v692 = vmul.f32 %v670, 1.442695
    %v693 = vpow.pop %v692
    %v694 = vmul.f32 %v671, 1.442695
    %v695 = vpow.pop %v694
    %v696 = vmul.f32 %v672, 1.442695
    %v697 = vpow.pop %v696
    %v698 = vmul.f32 %v673, 1.442695
    %v699 = vpow.pop %v698
    %v700 = vmul.f32 %v674, 1.442695
    %v701 = vpow.pop %v700
    %v702 = vmul.f32 %v675, 1.442695
    %v703 = vpow.pop %v702
    %v704 = vmul.f32 %v676, 1.442695
    %v705 = vpow.pop %v704
    %v706 = vmul.f32 %v677, 1.442695
    %v707 = vpow.pop %v706
    %v708 = vmul.f32 %v678, 1.442695
    %v709 = vpow.pop %v708
    %v710 = vmul.f32 %v679, 1.442695
    %v711 = vpow.pop %v710
    %712 = vadd.xlane.f32.xlu0 %v681
    %v713 = vpop.xlane.xlu0 %712
    %714 = vadd.xlane.f32.xlu0 %v683
    %v715 = vpop.xlane.xlu0 %714
    %716 = vadd.xlane.f32.xlu0 %v685
    %v717 = vpop.xlane.xlu0 %716
    %718 = vadd.xlane.f32.xlu0 %v687
    %v719 = vpop.xlane.xlu0 %718
    %720 = vadd.xlane.f32.xlu0 %v689
    %v721 = vpop.xlane.xlu0 %720
    %722 = vadd.xlane.f32.xlu0 %v691
    %v723 = vpop.xlane.xlu0 %722
    %724 = vadd.xlane.f32.xlu0 %v693
    %v725 = vpop.xlane.xlu0 %724
    %726 = vadd.xlane.f32.xlu0 %v695
    %v727 = vpop.xlane.xlu0 %726
    %728 = vadd.xlane.f32.xlu0 %v697
    %v729 = vpop.xlane.xlu0 %728
    %730 = vadd.xlane.f32.xlu0 %v699
    %v731 = vpop.xlane.xlu0 %730
    %732 = vadd.xlane.f32.xlu0 %v701
    %v733 = vpop.xlane.xlu0 %732
    %734 = vadd.xlane.f32.xlu0 %v703
    %v735 = vpop.xlane.xlu0 %734
    %736 = vadd.xlane.f32.xlu0 %v705
    %v737 = vpop.xlane.xlu0 %736
    %738 = vadd.xlane.f32.xlu0 %v707
    %v739 = vpop.xlane.xlu0 %738
    %740 = vadd.xlane.f32.xlu0 %v709
    %v741 = vpop.xlane.xlu0 %740
    %742 = vadd.xlane.f32.xlu0 %v711
    %v743 = vpop.xlane.xlu0 %742
    %v744 = vlog2.pop %v713
    %v745 = vmul.f32 %v744, 0.6931472
    %v746 = vlog2.pop %v715
    %v747 = vmul.f32 %v746, 0.6931472
    %v748 = vlog2.pop %v717
    %v749 = vmul.f32 %v748, 0.6931472
    %v750 = vlog2.pop %v719
    %v751 = vmul.f32 %v750, 0.6931472
    %v752 = vlog2.pop %v721
    %v753 = vmul.f32 %v752, 0.6931472
    %v754 = vlog2.pop %v723
    %v755 = vmul.f32 %v754, 0.6931472
    %v756 = vlog2.pop %v725
    %v757 = vmul.f32 %v756, 0.6931472
    %v758 = vlog2.pop %v727
    %v759 = vmul.f32 %v758, 0.6931472
    %v760 = vlog2.pop %v729
    %v761 = vmul.f32 %v760, 0.6931472
    %v762 = vlog2.pop %v731
    %v763 = vmul.f32 %v762, 0.6931472
    %v764 = vlog2.pop %v733
    %v765 = vmul.f32 %v764, 0.6931472
    %v766 = vlog2.pop %v735
    %v767 = vmul.f32 %v766, 0.6931472
    %v768 = vlog2.pop %v737
    %v769 = vmul.f32 %v768, 0.6931472
    %v770 = vlog2.pop %v739
    %v771 = vmul.f32 %v770, 0.6931472
    %v772 = vlog2.pop %v741
    %v773 = vmul.f32 %v772, 0.6931472
    %v774 = vlog2.pop %v743
    %v775 = vmul.f32 %v774, 0.6931472
    %v776 = vsub.f32 %v648, %v745
    %v777 = vsub.f32 %v649, %v747
    %v778 = vsub.f32 %v650, %v749
    %v779 = vsub.f32 %v651, %v751
    %v780 = vsub.f32 %v652, %v753
    %v781 = vsub.f32 %v653, %v755
    %v782 = vsub.f32 %v654, %v757
    %v783 = vsub.f32 %v655, %v759
    %v784 = vsub.f32 %v656, %v761
    %v785 = vsub.f32 %v657, %v763
    %v786 = vsub.f32 %v658, %v765
    %v787 = vsub.f32 %v659, %v767
    %v788 = vsub.f32 %v660, %v769
    %v789 = vsub.f32 %v661, %v771
    %v790 = vsub.f32 %v662, %v773
    %v791 = vsub.f32 %v663, %v775
    %792 = vst [vmem:[%s5] sm:$0xff] %v776
    %793 = vst [vmem:[%s5 + $0x8] sm:$0xff] %v777
    %794 = vst [vmem:[%s5 + $0x10] sm:$0xff] %v778
    %795 = vst [vmem:[%s5 + $0x18] sm:$0xff] %v779
    %796 = vst [vmem:[%s5 + $0x20] sm:$0xff] %v780
    %797 = vst [vmem:[%s5 + $0x28] sm:$0xff] %v781
    %798 = vst [vmem:[%s5 + $0x30] sm:$0xff] %v782
    %799 = vst [vmem:[%s5 + $0x38] sm:$0xff] %v783
    %800 = vst [vmem:[%s5 + $0x40] sm:$0xff] %v784
    %801 = vst [vmem:[%s5 + $0x48] sm:$0xff] %v785
    %802 = vst [vmem:[%s5 + $0x50] sm:$0xff] %v786
    %803 = vst [vmem:[%s5 + $0x58] sm:$0xff] %v787
    %804 = vst [vmem:[%s5 + $0x60] sm:$0xff] %v788
    %805 = vst [vmem:[%s5 + $0x68] sm:$0xff] %v789
    %806 = vst [vmem:[%s5 + $0x70] sm:$0xff] %v790
    %807 = vst [vmem:[%s5 + $0x78] sm:$0xff] %v791
  $region29: #{graphsage_forward.3} parent=0 // pred_fallthru
    _
  // Predicated region
  $region30: #{graphsage_forward.3} parent=0 // pred_check
    _
  $region31: #{graphsage_forward.3} parent=0 // pred_check_branch
    %809 = sbr.rel (0) target = $region33
  $region32: #{graphsage_forward.3} parent=0 // pred_region
    _
  $region33: #{graphsage_forward.3} parent=0 // pred_fallthru
    _
  // Predicated region
  $region34: #{graphsage_forward.3} parent=0 // pred_check
    _
  $region35: #{graphsage_forward.3} parent=0 // pred_check_branch
    %811 = sbr.rel (0) target = $region37
  $region36: #{graphsage_forward.3} parent=0 // pred_region
    _
  $region37: #{graphsage_forward.3} parent=0 // pred_fallthru
    _

// kernel: graphsage_forward.2
$region0: #{graphsage_forward.2}
  #allocation0 [shape = 'u32[]', space=smem, size = 0x4, offset = 0x4, fixed_abs, tag = 'smem constant byte address 0x4 - core index']
  #allocation1 [shape = 'u32[144,128]{1,0:T(1,128)}', space=vmem, size = 0x12000, scoped, tag = 'internal scratch']
  #allocation2 [shape = 'f32[128,128]{1,0:T(8,128)}', space=vmem, size = 0x10000, scoped, tag = 'scratch operand']
  %s0 = inlined_call_operand.vmem [shape: bf16[128,128], index: 0, kind: input, shape index: {}]
  %s1 = inlined_call_operand.vmem [shape: bf16[128,128], index: 1, kind: input, shape index: {}, may-alias: {1,2}]
  %s2 = inlined_call_operand.vmem [shape: bf16[128,128], index: 2, kind: input, shape index: {}, may-alias: {1,2}]
  %s3 = inlined_call_operand.vmem [shape: bf16[128,128], index: 3, kind: input, shape index: {}]
  %s4 = inlined_call_operand.vmem [shape: bf16[128,128], index: 4, kind: input, shape index: {}]
  %s5 = inlined_call_operand.vmem [shape: f32[1,128], index: 5, kind: input, shape index: {}]
  %s6 = inlined_call_operand.vmem [shape: bf16[128,128], index: 6, kind: input, shape index: {}]
  %s7 = inlined_call_operand.vmem [shape: bf16[128,128], index: 7, kind: output, shape index: {0}]
  %s8 = inlined_call_operand.vmem [shape: bf16[128,128], index: 8, kind: output, shape index: {1}]
  %9 = xla_tuple %s7, %s8
  %s10 = sld [smem:[#allocation0]]
  $region54: #{graphsage_forward.2} parent=0
    _
  %s12 = ssub.s32 1, %s10
  %s13 = scalar_select 0, %s12, %s10
  // Predicated region
  $region2: #{graphsage_forward.2} parent=0 // pred_check
    _
  $region3: #{graphsage_forward.2} parent=0 // pred_check_branch
    %15 = sbr.rel (0) target = $region5
  $region4: #{graphsage_forward.2} parent=0 // pred_region
    _
  $region5: #{graphsage_forward.2} parent=0 // pred_fallthru
    _
  // Predicated region
  $region6: #{graphsage_forward.2} parent=0 // pred_check
    _
  $region7: #{graphsage_forward.2} parent=0 // pred_check_branch
    %17 = sbr.rel (0) target = $region9
  $region8: #{graphsage_forward.2} parent=0 // pred_region
    _
  $region9: #{graphsage_forward.2} parent=0 // pred_fallthru
    _
  // Predicated region
  $region10: #{graphsage_forward.2} parent=0 // pred_check
    _
  $region11: #{graphsage_forward.2} parent=0 // pred_check_branch
    %19 = sbr.rel (0) target = $region13
  $region12: #{graphsage_forward.2} parent=0 // pred_region
    _
  $region13: #{graphsage_forward.2} parent=0 // pred_fallthru
    _
  // Predicated region
  $region14: #{graphsage_forward.2} parent=0 // pred_check
    _
  $region15: #{graphsage_forward.2} parent=0 // pred_check_branch
    %21 = sbr.rel (0) target = $region17
  $region16: #{graphsage_forward.2} parent=0 // pred_region
    _
  $region17: #{graphsage_forward.2} parent=0 // pred_fallthru
    _
  // Predicated region
  $region18: #{graphsage_forward.2} parent=0 // pred_check
    _
  $region19: #{graphsage_forward.2} parent=0 // pred_check_branch
    %23 = sbr.rel (0) target = $region21
  $region20: #{graphsage_forward.2} parent=0 // pred_region
    _
  $region21: #{graphsage_forward.2} parent=0 // pred_fallthru
    _
  // Predicated region
  $region22: #{graphsage_forward.2} parent=0 // pred_check
    _
  $region23: #{graphsage_forward.2} parent=0 // pred_check_branch
    %25 = sbr.rel (0) target = $region25
  $region24: #{graphsage_forward.2} parent=0 // pred_region
    _
  $region25: #{graphsage_forward.2} parent=0 // pred_fallthru
    _
  // Predicated region
  $region26: #{graphsage_forward.2} parent=0 // pred_check
    _
  $region27: #{graphsage_forward.2} parent=0 // pred_check_branch
    %27 = sbr.rel (0) target = $region29
  $region28: #{graphsage_forward.2} parent=0 // pred_region
    _
  $region29: #{graphsage_forward.2} parent=0 // pred_fallthru
    _
  %p29 = scmp.eq.s32.totalorder 0, 0
  // Predicated region
  $region30: #{graphsage_forward.2} parent=0 // pred_check
    %p30 = pneg %p29
  $region31: #{graphsage_forward.2} parent=0 // pred_check_branch
    %32 = sbr.rel (%p30) target = $region33
  $region32: #{graphsage_forward.2} parent=0 // pred_region
    %33 = vst [vmem:[#allocation2] sm:$0xff] 0.0
    %34 = vst [vmem:[#allocation2 + $0x8] sm:$0xff] 0.0
    %35 = vst [vmem:[#allocation2 + $0x10] sm:$0xff] 0.0
    %36 = vst [vmem:[#allocation2 + $0x18] sm:$0xff] 0.0
    %37 = vst [vmem:[#allocation2 + $0x20] sm:$0xff] 0.0
    %38 = vst [vmem:[#allocation2 + $0x28] sm:$0xff] 0.0
    %39 = vst [vmem:[#allocation2 + $0x30] sm:$0xff] 0.0
    %40 = vst [vmem:[#allocation2 + $0x38] sm:$0xff] 0.0
    %41 = vst [vmem:[#allocation2 + $0x40] sm:$0xff] 0.0
    %42 = vst [vmem:[#allocation2 + $0x48] sm:$0xff] 0.0
    %43 = vst [vmem:[#allocation2 + $0x50] sm:$0xff] 0.0
    %44 = vst [vmem:[#allocation2 + $0x58] sm:$0xff] 0.0
    %45 = vst [vmem:[#allocation2 + $0x60] sm:$0xff] 0.0
    %46 = vst [vmem:[#allocation2 + $0x68] sm:$0xff] 0.0
    %47 = vst [vmem:[#allocation2 + $0x70] sm:$0xff] 0.0
    %48 = vst [vmem:[#allocation2 + $0x78] sm:$0xff] 0.0
  $region33: #{graphsage_forward.2} parent=0 // pred_fallthru
    _
  %v49 = vld [vmem:[#allocation2] sm:$0xff]
  %v50 = vld [vmem:[#allocation2 + $0x8] sm:$0xff]
  %v51 = vld [vmem:[#allocation2 + $0x10] sm:$0xff]
  %v52 = vld [vmem:[#allocation2 + $0x18] sm:$0xff]
  %v53 = vld [vmem:[#allocation2 + $0x20] sm:$0xff]
  %v54 = vld [vmem:[#allocation2 + $0x28] sm:$0xff]
  %v55 = vld [vmem:[#allocation2 + $0x30] sm:$0xff]
  %v56 = vld [vmem:[#allocation2 + $0x38] sm:$0xff]
  %v57 = vld [vmem:[#allocation2 + $0x40] sm:$0xff]
  %v58 = vld [vmem:[#allocation2 + $0x48] sm:$0xff]
  %v59 = vld [vmem:[#allocation2 + $0x50] sm:$0xff]
  %v60 = vld [vmem:[#allocation2 + $0x58] sm:$0xff]
  %v61 = vld [vmem:[#allocation2 + $0x60] sm:$0xff]
  %v62 = vld [vmem:[#allocation2 + $0x68] sm:$0xff]
  %v63 = vld [vmem:[#allocation2 + $0x70] sm:$0xff]
  %v64 = vld [vmem:[#allocation2 + $0x78] sm:$0xff]
  %v65 = vld [vmem:[%s0] sm:$0xf]
  %v66 = vld [vmem:[%s0 + $0x4] sm:$0xf]
  %v67 = vld [vmem:[%s0 + $0x8] sm:$0xf]
  %v68 = vld [vmem:[%s0 + $0xc] sm:$0xf]
  %v69 = vld [vmem:[%s0 + $0x10] sm:$0xf]
  %v70 = vld [vmem:[%s0 + $0x14] sm:$0xf]
  %v71 = vld [vmem:[%s0 + $0x18] sm:$0xf]
  %v72 = vld [vmem:[%s0 + $0x1c] sm:$0xf]
  %v73 = vld [vmem:[%s0 + $0x20] sm:$0xf]
  %v74 = vld [vmem:[%s0 + $0x24] sm:$0xf]
  %v75 = vld [vmem:[%s0 + $0x28] sm:$0xf]
  %v76 = vld [vmem:[%s0 + $0x2c] sm:$0xf]
  %v77 = vld [vmem:[%s0 + $0x30] sm:$0xf]
  %v78 = vld [vmem:[%s0 + $0x34] sm:$0xf]
  %v79 = vld [vmem:[%s0 + $0x38] sm:$0xf]
  %v80 = vld [vmem:[%s0 + $0x3c] sm:$0xf]
  %v81 = vld [vmem:[%s1] sm:$0xf]
  %v82 = vld [vmem:[%s1 + $0x4] sm:$0xf]
  %v83 = vld [vmem:[%s1 + $0x8] sm:$0xf]
  %v84 = vld [vmem:[%s1 + $0xc] sm:$0xf]
  %v85 = vld [vmem:[%s1 + $0x10] sm:$0xf]
  %v86 = vld [vmem:[%s1 + $0x14] sm:$0xf]
  %v87 = vld [vmem:[%s1 + $0x18] sm:$0xf]
  %v88 = vld [vmem:[%s1 + $0x1c] sm:$0xf]
  %v89 = vld [vmem:[%s1 + $0x20] sm:$0xf]
  %v90 = vld [vmem:[%s1 + $0x24] sm:$0xf]
  %v91 = vld [vmem:[%s1 + $0x28] sm:$0xf]
  %v92 = vld [vmem:[%s1 + $0x2c] sm:$0xf]
  %v93 = vld [vmem:[%s1 + $0x30] sm:$0xf]
  %v94 = vld [vmem:[%s1 + $0x34] sm:$0xf]
  %v95 = vld [vmem:[%s1 + $0x38] sm:$0xf]
  %v96 = vld [vmem:[%s1 + $0x3c] sm:$0xf]
  %v113 = vunpack.c.l.b16 %v65
  %v114 = vunpack.c.l.b16 %v66
  %v115 = vunpack.c.l.b16 %v67
  %v116 = vunpack.c.l.b16 %v68
  %v117 = vunpack.c.l.b16 %v69
  %v118 = vunpack.c.l.b16 %v70
  %v119 = vunpack.c.l.b16 %v71
  %v120 = vunpack.c.l.b16 %v72
  %v121 = vunpack.c.l.b16 %v73
  %v122 = vunpack.c.l.b16 %v74
  %v123 = vunpack.c.l.b16 %v75
  %v124 = vunpack.c.l.b16 %v76
  %v125 = vunpack.c.l.b16 %v77
  %v126 = vunpack.c.l.b16 %v78
  %v127 = vunpack.c.l.b16 %v79
  %v128 = vunpack.c.l.b16 %v80
  %v129 = vpack.c.b16 %v114, %v113
  %v130 = vpack.c.b16 %v116, %v115
  %v131 = vpack.c.b16 %v118, %v117
  %v132 = vpack.c.b16 %v120, %v119
  %v133 = vpack.c.b16 %v122, %v121
  %v134 = vpack.c.b16 %v124, %v123
  %v135 = vpack.c.b16 %v126, %v125
  %v136 = vpack.c.b16 %v128, %v127
  %v161 = vunpack.c.l.b16 %v81
  %v162 = vunpack.c.l.b16 %v82
  %v163 = vunpack.c.l.b16 %v83
  %v164 = vunpack.c.l.b16 %v84
  %v165 = vunpack.c.l.b16 %v85
  %v166 = vunpack.c.l.b16 %v86
  %v167 = vunpack.c.l.b16 %v87
  %v168 = vunpack.c.l.b16 %v88
  %v169 = vunpack.c.l.b16 %v89
  %v170 = vunpack.c.l.b16 %v90
  %v171 = vunpack.c.l.b16 %v91
  %v172 = vunpack.c.l.b16 %v92
  %v173 = vunpack.c.l.b16 %v93
  %v174 = vunpack.c.l.b16 %v94
  %v175 = vunpack.c.l.b16 %v95
  %v176 = vunpack.c.l.b16 %v96
  %v177 = vpack.c.b16 %v162, %v161
  %v178 = vpack.c.b16 %v164, %v163
  %v179 = vpack.c.b16 %v166, %v165
  %v180 = vpack.c.b16 %v168, %v167
  %v181 = vpack.c.b16 %v170, %v169
  %v182 = vpack.c.b16 %v172, %v171
  %v183 = vpack.c.b16 %v174, %v173
  %v184 = vpack.c.b16 %v176, %v175
  %193 = vmatprep.subr.bf16.mxu0 0
  %194 = vmatpush1.bf16.msra.mxu0 %v184
  %195 = vmatprep.subr.bf16.mxu0 0
  %196 = vmatpush1.bf16.msra.mxu0 %v183
  %197 = vmatprep.subr.bf16.mxu0 0
  %198 = vmatpush1.bf16.msra.mxu0 %v182
  %199 = vmatprep.subr.bf16.mxu0 0
  %200 = vmatpush1.bf16.msra.mxu0 %v181
  %201 = vmatprep.subr.bf16.mxu0 0
  %202 = vmatpush1.bf16.msra.mxu0 %v180
  %203 = vmatprep.subr.bf16.mxu0 0
  %204 = vmatpush1.bf16.msra.mxu0 %v179
  %205 = vmatprep.subr.bf16.mxu0 0
  %206 = vmatpush1.bf16.msra.mxu0 %v178
  %207 = vmatprep.subr.bf16.mxu0 0
  %208 = vmatpush1.bf16.msra.mxu0 %v177
  %209 = vmatprep.subr.bf16.mxu0 0
  %210 = vmatpush2.bf16.msra.mxu0 0
  %211 = vmatprep.subr.bf16.mxu0 0
  %212 = vmatpush2.bf16.msra.mxu0 0
  %213 = vmatprep.subr.bf16.mxu0 0
  %214 = vmatpush2.bf16.msra.mxu0 0
  %215 = vmatprep.subr.bf16.mxu0 0
  %216 = vmatpush2.bf16.msra.mxu0 0
  %217 = vmatprep.subr.bf16.mxu0 0
  %218 = vmatpush2.bf16.msra.mxu0 0
  %219 = vmatprep.subr.bf16.mxu0 0
  %220 = vmatpush2.bf16.msra.mxu0 0
  %221 = vmatprep.subr.bf16.mxu0 0
  %222 = vmatpush2.bf16.msra.mxu0 0
  %223 = vmatprep.subr.bf16.mxu0 0
  %224 = vmatpush2.bf16.msra.mxu0 0
  %225 = vmatprep.mubr.bf16.mxu0 0
  %226 = vmatmul.mubr.bf16.gmra.mxu0 %v129
  %v227 = vpop.f32.mrf.mxu0
  %v228 = vadd.f32 0.0, %v227
  %v229 = vpop.f32.mrf.mxu0
  %v230 = vpop.f32.mrf.mxu0
  %v231 = vadd.f32 0.0, %v230
  %v232 = vpop.f32.mrf.mxu0
  %233 = vmatprep.mubr.bf16.mxu0 0
  %234 = vmatmul.mubr.bf16.gmra.mxu0 %v130
  %v235 = vpop.f32.mrf.mxu0
  %v236 = vadd.f32 0.0, %v235
  %v237 = vpop.f32.mrf.mxu0
  %v238 = vpop.f32.mrf.mxu0
  %v239 = vadd.f32 0.0, %v238
  %v240 = vpop.f32.mrf.mxu0
  %241 = vmatprep.mubr.bf16.mxu0 0
  %242 = vmatmul.mubr.bf16.gmra.mxu0 %v131
  %v243 = vpop.f32.mrf.mxu0
  %v244 = vadd.f32 0.0, %v243
  %v245 = vpop.f32.mrf.mxu0
  %v246 = vpop.f32.mrf.mxu0
  %v247 = vadd.f32 0.0, %v246
  %v248 = vpop.f32.mrf.mxu0
  %249 = vmatprep.mubr.bf16.mxu0 0
  %250 = vmatmul.mubr.bf16.gmra.mxu0 %v132
  %v251 = vpop.f32.mrf.mxu0
  %v252 = vadd.f32 0.0, %v251
  %v253 = vpop.f32.mrf.mxu0
  %v254 = vpop.f32.mrf.mxu0
  %v255 = vadd.f32 0.0, %v254
  %v256 = vpop.f32.mrf.mxu0
  %257 = vmatprep.mubr.bf16.mxu0 0
  %258 = vmatmul.mubr.bf16.gmra.mxu0 %v133
  %v259 = vpop.f32.mrf.mxu0
  %v260 = vadd.f32 0.0, %v259
  %v261 = vpop.f32.mrf.mxu0
  %v262 = vpop.f32.mrf.mxu0
  %v263 = vadd.f32 0.0, %v262
  %v264 = vpop.f32.mrf.mxu0
  %265 = vmatprep.mubr.bf16.mxu0 0
  %266 = vmatmul.mubr.bf16.gmra.mxu0 %v134
  %v267 = vpop.f32.mrf.mxu0
  %v268 = vadd.f32 0.0, %v267
  %v269 = vpop.f32.mrf.mxu0
  %v270 = vpop.f32.mrf.mxu0
  %v271 = vadd.f32 0.0, %v270
  %v272 = vpop.f32.mrf.mxu0
  %273 = vmatprep.mubr.bf16.mxu0 0
  %274 = vmatmul.mubr.bf16.gmra.mxu0 %v135
  %v275 = vpop.f32.mrf.mxu0
  %v276 = vadd.f32 0.0, %v275
  %v277 = vpop.f32.mrf.mxu0
  %v278 = vpop.f32.mrf.mxu0
  %v279 = vadd.f32 0.0, %v278
  %v280 = vpop.f32.mrf.mxu0
  %281 = vmatprep.mubr.bf16.mxu0 0
  %282 = vmatmul.mubr.bf16.gmra.mxu0 %v136
  %v283 = vpop.f32.mrf.mxu0
  %v284 = vadd.f32 0.0, %v283
  %v285 = vpop.f32.mrf.mxu0
  %v286 = vpop.f32.mrf.mxu0
  %v287 = vadd.f32 0.0, %v286
  %v288 = vpop.f32.mrf.mxu0
  %289 = vdwg.mxu0
  %v290 = vadd.f32 %v49, %v228
  %v291 = vadd.f32 %v50, %v231
  %v292 = vadd.f32 %v51, %v236
  %v293 = vadd.f32 %v52, %v239
  %v294 = vadd.f32 %v53, %v244
  %v295 = vadd.f32 %v54, %v247
  %v296 = vadd.f32 %v55, %v252
  %v297 = vadd.f32 %v56, %v255
  %v298 = vadd.f32 %v57, %v260
  %v299 = vadd.f32 %v58, %v263
  %v300 = vadd.f32 %v59, %v268
  %v301 = vadd.f32 %v60, %v271
  %v302 = vadd.f32 %v61, %v276
  %v303 = vadd.f32 %v62, %v279
  %v304 = vadd.f32 %v63, %v284
  %v305 = vadd.f32 %v64, %v287
  %306 = vst [vmem:[#allocation2] sm:$0xff] %v290
  %307 = vst [vmem:[#allocation2 + $0x8] sm:$0xff] %v291
  %308 = vst [vmem:[#allocation2 + $0x10] sm:$0xff] %v292
  %309 = vst [vmem:[#allocation2 + $0x18] sm:$0xff] %v293
  %310 = vst [vmem:[#allocation2 + $0x20] sm:$0xff] %v294
  %311 = vst [vmem:[#allocation2 + $0x28] sm:$0xff] %v295
  %312 = vst [vmem:[#allocation2 + $0x30] sm:$0xff] %v296
  %313 = vst [vmem:[#allocation2 + $0x38] sm:$0xff] %v297
  %314 = vst [vmem:[#allocation2 + $0x40] sm:$0xff] %v298
  %315 = vst [vmem:[#allocation2 + $0x48] sm:$0xff] %v299
  %316 = vst [vmem:[#allocation2 + $0x50] sm:$0xff] %v300
  %317 = vst [vmem:[#allocation2 + $0x58] sm:$0xff] %v301
  %318 = vst [vmem:[#allocation2 + $0x60] sm:$0xff] %v302
  %319 = vst [vmem:[#allocation2 + $0x68] sm:$0xff] %v303
  %320 = vst [vmem:[#allocation2 + $0x70] sm:$0xff] %v304
  %321 = vst [vmem:[#allocation2 + $0x78] sm:$0xff] %v305
  // Predicated region
  $region34: #{graphsage_forward.2} parent=0 // pred_check
    %p322 = pneg %p29
  $region35: #{graphsage_forward.2} parent=0 // pred_check_branch
    %324 = sbr.rel (%p322) target = $region37
  $region36: #{graphsage_forward.2} parent=0 // pred_region
    %v325 = vld [vmem:[#allocation2] sm:$0xff]
    %v326 = vld [vmem:[#allocation2 + $0x8] sm:$0xff]
    %v327 = vld [vmem:[#allocation2 + $0x10] sm:$0xff]
    %v328 = vld [vmem:[#allocation2 + $0x18] sm:$0xff]
    %v329 = vld [vmem:[#allocation2 + $0x20] sm:$0xff]
    %v330 = vld [vmem:[#allocation2 + $0x28] sm:$0xff]
    %v331 = vld [vmem:[#allocation2 + $0x30] sm:$0xff]
    %v332 = vld [vmem:[#allocation2 + $0x38] sm:$0xff]
    %v333 = vld [vmem:[#allocation2 + $0x40] sm:$0xff]
    %v334 = vld [vmem:[#allocation2 + $0x48] sm:$0xff]
    %v335 = vld [vmem:[#allocation2 + $0x50] sm:$0xff]
    %v336 = vld [vmem:[#allocation2 + $0x58] sm:$0xff]
    %v337 = vld [vmem:[#allocation2 + $0x60] sm:$0xff]
    %v338 = vld [vmem:[#allocation2 + $0x68] sm:$0xff]
    %v339 = vld [vmem:[#allocation2 + $0x70] sm:$0xff]
    %v340 = vld [vmem:[#allocation2 + $0x78] sm:$0xff]
    %v341 = vpack.c.bf16 %v326, %v325
    %v342 = vpack.c.bf16 %v328, %v327
    %v343 = vpack.c.bf16 %v330, %v329
    %v344 = vpack.c.bf16 %v332, %v331
    %v345 = vpack.c.bf16 %v334, %v333
    %v346 = vpack.c.bf16 %v336, %v335
    %v347 = vpack.c.bf16 %v338, %v337
    %v348 = vpack.c.bf16 %v340, %v339
    %v349 = vld [vmem:[%s3] sm:$0xf]
    %v350 = vld [vmem:[%s3 + $0x4] sm:$0xf]
    %v351 = vld [vmem:[%s3 + $0x8] sm:$0xf]
    %v352 = vld [vmem:[%s3 + $0xc] sm:$0xf]
    %v353 = vld [vmem:[%s3 + $0x10] sm:$0xf]
    %v354 = vld [vmem:[%s3 + $0x14] sm:$0xf]
    %v355 = vld [vmem:[%s3 + $0x18] sm:$0xf]
    %v356 = vld [vmem:[%s3 + $0x1c] sm:$0xf]
    %v357 = vld [vmem:[%s3 + $0x20] sm:$0xf]
    %v358 = vld [vmem:[%s3 + $0x24] sm:$0xf]
    %v359 = vld [vmem:[%s3 + $0x28] sm:$0xf]
    %v360 = vld [vmem:[%s3 + $0x2c] sm:$0xf]
    %v361 = vld [vmem:[%s3 + $0x30] sm:$0xf]
    %v362 = vld [vmem:[%s3 + $0x34] sm:$0xf]
    %v363 = vld [vmem:[%s3 + $0x38] sm:$0xf]
    %v364 = vld [vmem:[%s3 + $0x3c] sm:$0xf]
    %v365 = vld [vmem:[%s2] sm:$0xf]
    %v366 = vld [vmem:[%s2 + $0x4] sm:$0xf]
    %v367 = vld [vmem:[%s2 + $0x8] sm:$0xf]
    %v368 = vld [vmem:[%s2 + $0xc] sm:$0xf]
    %v369 = vld [vmem:[%s2 + $0x10] sm:$0xf]
    %v370 = vld [vmem:[%s2 + $0x14] sm:$0xf]
    %v371 = vld [vmem:[%s2 + $0x18] sm:$0xf]
    %v372 = vld [vmem:[%s2 + $0x1c] sm:$0xf]
    %v373 = vld [vmem:[%s2 + $0x20] sm:$0xf]
    %v374 = vld [vmem:[%s2 + $0x24] sm:$0xf]
    %v375 = vld [vmem:[%s2 + $0x28] sm:$0xf]
    %v376 = vld [vmem:[%s2 + $0x2c] sm:$0xf]
    %v377 = vld [vmem:[%s2 + $0x30] sm:$0xf]
    %v378 = vld [vmem:[%s2 + $0x34] sm:$0xf]
    %v379 = vld [vmem:[%s2 + $0x38] sm:$0xf]
    %v380 = vld [vmem:[%s2 + $0x3c] sm:$0xf]
    %v381 = vld [vmem:[%s4] sm:$0xf]
    %v382 = vld [vmem:[%s4 + $0x4] sm:$0xf]
    %v383 = vld [vmem:[%s4 + $0x8] sm:$0xf]
    %v384 = vld [vmem:[%s4 + $0xc] sm:$0xf]
    %v385 = vld [vmem:[%s4 + $0x10] sm:$0xf]
    %v386 = vld [vmem:[%s4 + $0x14] sm:$0xf]
    %v387 = vld [vmem:[%s4 + $0x18] sm:$0xf]
    %v388 = vld [vmem:[%s4 + $0x1c] sm:$0xf]
    %v389 = vld [vmem:[%s4 + $0x20] sm:$0xf]
    %v390 = vld [vmem:[%s4 + $0x24] sm:$0xf]
    %v391 = vld [vmem:[%s4 + $0x28] sm:$0xf]
    %v392 = vld [vmem:[%s4 + $0x2c] sm:$0xf]
    %v393 = vld [vmem:[%s4 + $0x30] sm:$0xf]
    %v394 = vld [vmem:[%s4 + $0x34] sm:$0xf]
    %v395 = vld [vmem:[%s4 + $0x38] sm:$0xf]
    %v396 = vld [vmem:[%s4 + $0x3c] sm:$0xf]
    %v413 = vunpack.c.l.b16 %v365
    %v414 = vunpack.c.l.b16 %v366
    %v415 = vunpack.c.l.b16 %v367
    %v416 = vunpack.c.l.b16 %v368
    %v417 = vunpack.c.l.b16 %v369
    %v418 = vunpack.c.l.b16 %v370
    %v419 = vunpack.c.l.b16 %v371
    %v420 = vunpack.c.l.b16 %v372
    %v421 = vunpack.c.l.b16 %v373
    %v422 = vunpack.c.l.b16 %v374
    %v423 = vunpack.c.l.b16 %v375
    %v424 = vunpack.c.l.b16 %v376
    %v425 = vunpack.c.l.b16 %v377
    %v426 = vunpack.c.l.b16 %v378
    %v427 = vunpack.c.l.b16 %v379
    %v428 = vunpack.c.l.b16 %v380
    %v429 = vpack.c.b16 %v414, %v413
    %v430 = vpack.c.b16 %v416, %v415
    %v431 = vpack.c.b16 %v418, %v417
    %v432 = vpack.c.b16 %v420, %v419
    %v433 = vpack.c.b16 %v422, %v421
    %v434 = vpack.c.b16 %v424, %v423
    %v435 = vpack.c.b16 %v426, %v425
    %v436 = vpack.c.b16 %v428, %v427
    %v461 = vunpack.c.l.b16 %v381
    %v462 = vunpack.c.l.b16 %v382
    %v463 = vunpack.c.l.b16 %v383
    %v464 = vunpack.c.l.b16 %v384
    %v465 = vunpack.c.l.b16 %v385
    %v466 = vunpack.c.l.b16 %v386
    %v467 = vunpack.c.l.b16 %v387
    %v468 = vunpack.c.l.b16 %v388
    %v469 = vunpack.c.l.b16 %v389
    %v470 = vunpack.c.l.b16 %v390
    %v471 = vunpack.c.l.b16 %v391
    %v472 = vunpack.c.l.b16 %v392
    %v473 = vunpack.c.l.b16 %v393
    %v474 = vunpack.c.l.b16 %v394
    %v475 = vunpack.c.l.b16 %v395
    %v476 = vunpack.c.l.b16 %v396
    %v477 = vpack.c.b16 %v462, %v461
    %v478 = vpack.c.b16 %v464, %v463
    %v479 = vpack.c.b16 %v466, %v465
    %v480 = vpack.c.b16 %v468, %v467
    %v481 = vpack.c.b16 %v470, %v469
    %v482 = vpack.c.b16 %v472, %v471
    %v483 = vpack.c.b16 %v474, %v473
    %v484 = vpack.c.b16 %v476, %v475
    %493 = vmatprep.subr.bf16.mxu0 0
    %494 = vmatpush1.bf16.msra.mxu0 %v484
    %495 = vmatprep.subr.bf16.mxu0 0
    %496 = vmatpush1.bf16.msra.mxu0 %v483
    %497 = vmatprep.subr.bf16.mxu0 0
    %498 = vmatpush1.bf16.msra.mxu0 %v482
    %499 = vmatprep.subr.bf16.mxu0 0
    %500 = vmatpush1.bf16.msra.mxu0 %v481
    %501 = vmatprep.subr.bf16.mxu0 0
    %502 = vmatpush1.bf16.msra.mxu0 %v480
    %503 = vmatprep.subr.bf16.mxu0 0
    %504 = vmatpush1.bf16.msra.mxu0 %v479
    %505 = vmatprep.subr.bf16.mxu0 0
    %506 = vmatpush1.bf16.msra.mxu0 %v478
    %507 = vmatprep.subr.bf16.mxu0 0
    %508 = vmatpush1.bf16.msra.mxu0 %v477
    %509 = vmatprep.subr.bf16.mxu0 0
    %510 = vmatpush2.bf16.msra.mxu0 0
    %511 = vmatprep.subr.bf16.mxu0 0
    %512 = vmatpush2.bf16.msra.mxu0 0
    %513 = vmatprep.subr.bf16.mxu0 0
    %514 = vmatpush2.bf16.msra.mxu0 0
    %515 = vmatprep.subr.bf16.mxu0 0
    %516 = vmatpush2.bf16.msra.mxu0 0
    %517 = vmatprep.subr.bf16.mxu0 0
    %518 = vmatpush2.bf16.msra.mxu0 0
    %519 = vmatprep.subr.bf16.mxu0 0
    %520 = vmatpush2.bf16.msra.mxu0 0
    %521 = vmatprep.subr.bf16.mxu0 0
    %522 = vmatpush2.bf16.msra.mxu0 0
    %523 = vmatprep.subr.bf16.mxu0 0
    %524 = vmatpush2.bf16.msra.mxu0 0
    %525 = vmatprep.mubr.bf16.mxu0 0
    %526 = vmatmul.mubr.bf16.gmra.mxu0 %v429
    %v527 = vpop.f32.mrf.mxu0
    %v528 = vadd.f32 0.0, %v527
    %v529 = vpop.f32.mrf.mxu0
    %v530 = vpop.f32.mrf.mxu0
    %v531 = vadd.f32 0.0, %v530
    %v532 = vpop.f32.mrf.mxu0
    %533 = vmatprep.mubr.bf16.mxu0 0
    %534 = vmatmul.mubr.bf16.gmra.mxu0 %v430
    %v535 = vpop.f32.mrf.mxu0
    %v536 = vadd.f32 0.0, %v535
    %v537 = vpop.f32.mrf.mxu0
    %v538 = vpop.f32.mrf.mxu0
    %v539 = vadd.f32 0.0, %v538
    %v540 = vpop.f32.mrf.mxu0
    %541 = vmatprep.mubr.bf16.mxu0 0
    %542 = vmatmul.mubr.bf16.gmra.mxu0 %v431
    %v543 = vpop.f32.mrf.mxu0
    %v544 = vadd.f32 0.0, %v543
    %v545 = vpop.f32.mrf.mxu0
    %v546 = vpop.f32.mrf.mxu0
    %v547 = vadd.f32 0.0, %v546
    %v548 = vpop.f32.mrf.mxu0
    %549 = vmatprep.mubr.bf16.mxu0 0
    %550 = vmatmul.mubr.bf16.gmra.mxu0 %v432
    %v551 = vpop.f32.mrf.mxu0
    %v552 = vadd.f32 0.0, %v551
    %v553 = vpop.f32.mrf.mxu0
    %v554 = vpop.f32.mrf.mxu0
    %v555 = vadd.f32 0.0, %v554
    %v556 = vpop.f32.mrf.mxu0
    %557 = vmatprep.mubr.bf16.mxu0 0
    %558 = vmatmul.mubr.bf16.gmra.mxu0 %v433
    %v559 = vpop.f32.mrf.mxu0
    %v560 = vadd.f32 0.0, %v559
    %v561 = vpop.f32.mrf.mxu0
    %v562 = vpop.f32.mrf.mxu0
    %v563 = vadd.f32 0.0, %v562
    %v564 = vpop.f32.mrf.mxu0
    %565 = vmatprep.mubr.bf16.mxu0 0
    %566 = vmatmul.mubr.bf16.gmra.mxu0 %v434
    %v567 = vpop.f32.mrf.mxu0
    %v568 = vadd.f32 0.0, %v567
    %v569 = vpop.f32.mrf.mxu0
    %v570 = vpop.f32.mrf.mxu0
    %v571 = vadd.f32 0.0, %v570
    %v572 = vpop.f32.mrf.mxu0
    %573 = vmatprep.mubr.bf16.mxu0 0
    %574 = vmatmul.mubr.bf16.gmra.mxu0 %v435
    %v575 = vpop.f32.mrf.mxu0
    %v576 = vadd.f32 0.0, %v575
    %v577 = vpop.f32.mrf.mxu0
    %v578 = vpop.f32.mrf.mxu0
    %v579 = vadd.f32 0.0, %v578
    %v580 = vpop.f32.mrf.mxu0
    %581 = vmatprep.mubr.bf16.mxu0 0
    %582 = vmatmul.mubr.bf16.gmra.mxu0 %v436
    %v583 = vpop.f32.mrf.mxu0
    %v584 = vadd.f32 0.0, %v583
    %v585 = vpop.f32.mrf.mxu0
    %v586 = vpop.f32.mrf.mxu0
    %v587 = vadd.f32 0.0, %v586
    %v588 = vpop.f32.mrf.mxu0
    %589 = vdwg.mxu0
    %v606 = vunpack.c.l.b16 %v349
    %v607 = vunpack.c.l.b16 %v350
    %v608 = vunpack.c.l.b16 %v351
    %v609 = vunpack.c.l.b16 %v352
    %v610 = vunpack.c.l.b16 %v353
    %v611 = vunpack.c.l.b16 %v354
    %v612 = vunpack.c.l.b16 %v355
    %v613 = vunpack.c.l.b16 %v356
    %v614 = vunpack.c.l.b16 %v357
    %v615 = vunpack.c.l.b16 %v358
    %v616 = vunpack.c.l.b16 %v359
    %v617 = vunpack.c.l.b16 %v360
    %v618 = vunpack.c.l.b16 %v361
    %v619 = vunpack.c.l.b16 %v362
    %v620 = vunpack.c.l.b16 %v363
    %v621 = vunpack.c.l.b16 %v364
    %v622 = vpack.c.b16 %v607, %v606
    %v623 = vpack.c.b16 %v609, %v608
    %v624 = vpack.c.b16 %v611, %v610
    %v625 = vpack.c.b16 %v613, %v612
    %v626 = vpack.c.b16 %v615, %v614
    %v627 = vpack.c.b16 %v617, %v616
    %v628 = vpack.c.b16 %v619, %v618
    %v629 = vpack.c.b16 %v621, %v620
    %638 = vmatprep.subr.bf16.mxu0 0
    %639 = vmatpush1.bf16.msra.mxu0 %v629
    %640 = vmatprep.subr.bf16.mxu0 0
    %641 = vmatpush1.bf16.msra.mxu0 %v628
    %642 = vmatprep.subr.bf16.mxu0 0
    %643 = vmatpush1.bf16.msra.mxu0 %v627
    %644 = vmatprep.subr.bf16.mxu0 0
    %645 = vmatpush1.bf16.msra.mxu0 %v626
    %646 = vmatprep.subr.bf16.mxu0 0
    %647 = vmatpush1.bf16.msra.mxu0 %v625
    %648 = vmatprep.subr.bf16.mxu0 0
    %649 = vmatpush1.bf16.msra.mxu0 %v624
    %650 = vmatprep.subr.bf16.mxu0 0
    %651 = vmatpush1.bf16.msra.mxu0 %v623
    %652 = vmatprep.subr.bf16.mxu0 0
    %653 = vmatpush1.bf16.msra.mxu0 %v622
    %654 = vmatprep.subr.bf16.mxu0 0
    %655 = vmatpush2.bf16.msra.mxu0 0
    %656 = vmatprep.subr.bf16.mxu0 0
    %657 = vmatpush2.bf16.msra.mxu0 0
    %658 = vmatprep.subr.bf16.mxu0 0
    %659 = vmatpush2.bf16.msra.mxu0 0
    %660 = vmatprep.subr.bf16.mxu0 0
    %661 = vmatpush2.bf16.msra.mxu0 0
    %662 = vmatprep.subr.bf16.mxu0 0
    %663 = vmatpush2.bf16.msra.mxu0 0
    %664 = vmatprep.subr.bf16.mxu0 0
    %665 = vmatpush2.bf16.msra.mxu0 0
    %666 = vmatprep.subr.bf16.mxu0 0
    %667 = vmatpush2.bf16.msra.mxu0 0
    %668 = vmatprep.subr.bf16.mxu0 0
    %669 = vmatpush2.bf16.msra.mxu0 0
    %670 = vmatprep.mubr.bf16.mxu0 0
    %671 = vmatmul.mubr.bf16.gmra.mxu0 %v341
    %v672 = vpop.f32.mrf.mxu0
    %v673 = vadd.f32 %v528, %v672
    %v674 = vpop.f32.mrf.mxu0
    %v675 = vpop.f32.mrf.mxu0
    %v676 = vadd.f32 %v531, %v675
    %v677 = vpop.f32.mrf.mxu0
    %678 = vmatprep.mubr.bf16.mxu0 0
    %679 = vmatmul.mubr.bf16.gmra.mxu0 %v342
    %v680 = vpop.f32.mrf.mxu0
    %v681 = vadd.f32 %v536, %v680
    %v682 = vpop.f32.mrf.mxu0
    %v683 = vpop.f32.mrf.mxu0
    %v684 = vadd.f32 %v539, %v683
    %v685 = vpop.f32.mrf.mxu0
    %686 = vmatprep.mubr.bf16.mxu0 0
    %687 = vmatmul.mubr.bf16.gmra.mxu0 %v343
    %v688 = vpop.f32.mrf.mxu0
    %v689 = vadd.f32 %v544, %v688
    %v690 = vpop.f32.mrf.mxu0
    %v691 = vpop.f32.mrf.mxu0
    %v692 = vadd.f32 %v547, %v691
    %v693 = vpop.f32.mrf.mxu0
    %694 = vmatprep.mubr.bf16.mxu0 0
    %695 = vmatmul.mubr.bf16.gmra.mxu0 %v344
    %v696 = vpop.f32.mrf.mxu0
    %v697 = vadd.f32 %v552, %v696
    %v698 = vpop.f32.mrf.mxu0
    %v699 = vpop.f32.mrf.mxu0
    %v700 = vadd.f32 %v555, %v699
    %v701 = vpop.f32.mrf.mxu0
    %702 = vmatprep.mubr.bf16.mxu0 0
    %703 = vmatmul.mubr.bf16.gmra.mxu0 %v345
    %v704 = vpop.f32.mrf.mxu0
    %v705 = vadd.f32 %v560, %v704
    %v706 = vpop.f32.mrf.mxu0
    %v707 = vpop.f32.mrf.mxu0
    %v708 = vadd.f32 %v563, %v707
    %v709 = vpop.f32.mrf.mxu0
    %710 = vmatprep.mubr.bf16.mxu0 0
    %711 = vmatmul.mubr.bf16.gmra.mxu0 %v346
    %v712 = vpop.f32.mrf.mxu0
    %v713 = vadd.f32 %v568, %v712
    %v714 = vpop.f32.mrf.mxu0
    %v715 = vpop.f32.mrf.mxu0
    %v716 = vadd.f32 %v571, %v715
    %v717 = vpop.f32.mrf.mxu0
    %718 = vmatprep.mubr.bf16.mxu0 0
    %719 = vmatmul.mubr.bf16.gmra.mxu0 %v347
    %v720 = vpop.f32.mrf.mxu0
    %v721 = vadd.f32 %v576, %v720
    %v722 = vpop.f32.mrf.mxu0
    %v723 = vpop.f32.mrf.mxu0
    %v724 = vadd.f32 %v579, %v723
    %v725 = vpop.f32.mrf.mxu0
    %726 = vmatprep.mubr.bf16.mxu0 0
    %727 = vmatmul.mubr.bf16.gmra.mxu0 %v348
    %v728 = vpop.f32.mrf.mxu0
    %v729 = vadd.f32 %v584, %v728
    %v730 = vpop.f32.mrf.mxu0
    %v731 = vpop.f32.mrf.mxu0
    %v732 = vadd.f32 %v587, %v731
    %v733 = vpop.f32.mrf.mxu0
    %734 = vdwg.mxu0
    %v735 = vld [vmem:[%s5] sm:$0x1]
    %v737 = vlaneseq
    %v738 = vshrl.u32 %v737, 7
    %v739 = vsub.s32 0, %v738
    %v740 = vrot.slane %v735, %v739
    %v742 = vadd.f32 %v673, %v740
    %v743 = vadd.f32 %v676, %v740
    %v744 = vadd.f32 %v681, %v740
    %v745 = vadd.f32 %v684, %v740
    %v746 = vadd.f32 %v689, %v740
    %v747 = vadd.f32 %v692, %v740
    %v748 = vadd.f32 %v697, %v740
    %v749 = vadd.f32 %v700, %v740
    %v750 = vadd.f32 %v705, %v740
    %v751 = vadd.f32 %v708, %v740
    %v752 = vadd.f32 %v713, %v740
    %v753 = vadd.f32 %v716, %v740
    %v754 = vadd.f32 %v721, %v740
    %v755 = vadd.f32 %v724, %v740
    %v756 = vadd.f32 %v729, %v740
    %v757 = vadd.f32 %v732, %v740
    %v758 = vmax.f32 %v742, 0.0
    %v759 = vmax.f32 %v743, 0.0
    %v760 = vmax.f32 %v744, 0.0
    %v761 = vmax.f32 %v745, 0.0
    %v762 = vmax.f32 %v746, 0.0
    %v763 = vmax.f32 %v747, 0.0
    %v764 = vmax.f32 %v748, 0.0
    %v765 = vmax.f32 %v749, 0.0
    %v766 = vmax.f32 %v750, 0.0
    %v767 = vmax.f32 %v751, 0.0
    %v768 = vmax.f32 %v752, 0.0
    %v769 = vmax.f32 %v753, 0.0
    %v770 = vmax.f32 %v754, 0.0
    %v771 = vmax.f32 %v755, 0.0
    %v772 = vmax.f32 %v756, 0.0
    %v773 = vmax.f32 %v757, 0.0
    %v774 = vpack.c.bf16 %v759, %v758
    %v775 = vpack.c.bf16 %v761, %v760
    %v776 = vpack.c.bf16 %v763, %v762
    %v777 = vpack.c.bf16 %v765, %v764
    %v778 = vpack.c.bf16 %v767, %v766
    %v779 = vpack.c.bf16 %v769, %v768
    %v780 = vpack.c.bf16 %v771, %v770
    %v781 = vpack.c.bf16 %v773, %v772
    %v790 = vunpack.c.l.b16 %v774
    %v791 = vunpack.c.h.b16 %v774
    %v792 = vunpack.c.l.b16 %v775
    %v793 = vunpack.c.h.b16 %v775
    %v794 = vunpack.c.l.b16 %v776
    %v795 = vunpack.c.h.b16 %v776
    %v796 = vunpack.c.l.b16 %v777
    %v797 = vunpack.c.h.b16 %v777
    %v798 = vunpack.c.l.b16 %v778
    %v799 = vunpack.c.h.b16 %v778
    %v800 = vunpack.c.l.b16 %v779
    %v801 = vunpack.c.h.b16 %v779
    %v802 = vunpack.c.l.b16 %v780
    %v803 = vunpack.c.h.b16 %v780
    %v804 = vunpack.c.l.b16 %v781
    %v805 = vunpack.c.h.b16 %v781
    %v806 = vpack.c.b16 %v790, %v790
    %v807 = vpack.c.b16 %v791, %v791
    %v808 = vpack.c.b16 %v792, %v792
    %v809 = vpack.c.b16 %v793, %v793
    %v810 = vpack.c.b16 %v794, %v794
    %v811 = vpack.c.b16 %v795, %v795
    %v812 = vpack.c.b16 %v796, %v796
    %v813 = vpack.c.b16 %v797, %v797
    %v814 = vpack.c.b16 %v798, %v798
    %v815 = vpack.c.b16 %v799, %v799
    %v816 = vpack.c.b16 %v800, %v800
    %v817 = vpack.c.b16 %v801, %v801
    %v818 = vpack.c.b16 %v802, %v802
    %v819 = vpack.c.b16 %v803, %v803
    %v820 = vpack.c.b16 %v804, %v804
    %v821 = vpack.c.b16 %v805, %v805
    %838 = vst [vmem:[%s7] sm:$0xf] %v806
    %839 = vst [vmem:[%s7 + $0x4] sm:$0xf] %v807
    %840 = vst [vmem:[%s7 + $0x8] sm:$0xf] %v808
    %841 = vst [vmem:[%s7 + $0xc] sm:$0xf] %v809
    %842 = vst [vmem:[%s7 + $0x10] sm:$0xf] %v810
    %843 = vst [vmem:[%s7 + $0x14] sm:$0xf] %v811
    %844 = vst [vmem:[%s7 + $0x18] sm:$0xf] %v812
    %845 = vst [vmem:[%s7 + $0x1c] sm:$0xf] %v813
    %846 = vst [vmem:[%s7 + $0x20] sm:$0xf] %v814
    %847 = vst [vmem:[%s7 + $0x24] sm:$0xf] %v815
    %848 = vst [vmem:[%s7 + $0x28] sm:$0xf] %v816
    %849 = vst [vmem:[%s7 + $0x2c] sm:$0xf] %v817
    %850 = vst [vmem:[%s7 + $0x30] sm:$0xf] %v818
    %851 = vst [vmem:[%s7 + $0x34] sm:$0xf] %v819
    %852 = vst [vmem:[%s7 + $0x38] sm:$0xf] %v820
    %853 = vst [vmem:[%s7 + $0x3c] sm:$0xf] %v821
    %v854 = vld [vmem:[%s6] sm:$0xf]
    %v855 = vld [vmem:[%s6 + $0x4] sm:$0xf]
    %v856 = vld [vmem:[%s6 + $0x8] sm:$0xf]
    %v857 = vld [vmem:[%s6 + $0xc] sm:$0xf]
    %v858 = vld [vmem:[%s6 + $0x10] sm:$0xf]
    %v859 = vld [vmem:[%s6 + $0x14] sm:$0xf]
    %v860 = vld [vmem:[%s6 + $0x18] sm:$0xf]
    %v861 = vld [vmem:[%s6 + $0x1c] sm:$0xf]
    %v862 = vld [vmem:[%s6 + $0x20] sm:$0xf]
    %v863 = vld [vmem:[%s6 + $0x24] sm:$0xf]
    %v864 = vld [vmem:[%s6 + $0x28] sm:$0xf]
    %v865 = vld [vmem:[%s6 + $0x2c] sm:$0xf]
    %v866 = vld [vmem:[%s6 + $0x30] sm:$0xf]
    %v867 = vld [vmem:[%s6 + $0x34] sm:$0xf]
    %v868 = vld [vmem:[%s6 + $0x38] sm:$0xf]
    %v869 = vld [vmem:[%s6 + $0x3c] sm:$0xf]
    %v886 = vunpack.c.l.b16 %v854
    %v887 = vunpack.c.l.b16 %v855
    %v888 = vunpack.c.l.b16 %v856
    %v889 = vunpack.c.l.b16 %v857
    %v890 = vunpack.c.l.b16 %v858
    %v891 = vunpack.c.l.b16 %v859
    %v892 = vunpack.c.l.b16 %v860
    %v893 = vunpack.c.l.b16 %v861
    %v894 = vunpack.c.l.b16 %v862
    %v895 = vunpack.c.l.b16 %v863
    %v896 = vunpack.c.l.b16 %v864
    %v897 = vunpack.c.l.b16 %v865
    %v898 = vunpack.c.l.b16 %v866
    %v899 = vunpack.c.l.b16 %v867
    %v900 = vunpack.c.l.b16 %v868
    %v901 = vunpack.c.l.b16 %v869
    %v902 = vpack.c.b16 %v887, %v886
    %v903 = vpack.c.b16 %v889, %v888
    %v904 = vpack.c.b16 %v891, %v890
    %v905 = vpack.c.b16 %v893, %v892
    %v906 = vpack.c.b16 %v895, %v894
    %v907 = vpack.c.b16 %v897, %v896
    %v908 = vpack.c.b16 %v899, %v898
    %v909 = vpack.c.b16 %v901, %v900
    %918 = vmatprep.subr.bf16.mxu0 0
    %919 = vmatpush1.bf16.msra.mxu0 %v909
    %920 = vmatprep.subr.bf16.mxu0 0
    %921 = vmatpush1.bf16.msra.mxu0 %v908
    %922 = vmatprep.subr.bf16.mxu0 0
    %923 = vmatpush1.bf16.msra.mxu0 %v907
    %924 = vmatprep.subr.bf16.mxu0 0
    %925 = vmatpush1.bf16.msra.mxu0 %v906
    %926 = vmatprep.subr.bf16.mxu0 0
    %927 = vmatpush1.bf16.msra.mxu0 %v905
    %928 = vmatprep.subr.bf16.mxu0 0
    %929 = vmatpush1.bf16.msra.mxu0 %v904
    %930 = vmatprep.subr.bf16.mxu0 0
    %931 = vmatpush1.bf16.msra.mxu0 %v903
    %932 = vmatprep.subr.bf16.mxu0 0
    %933 = vmatpush1.bf16.msra.mxu0 %v902
    %934 = vmatprep.subr.bf16.mxu0 0
    %935 = vmatpush2.bf16.msra.mxu0 0
    %936 = vmatprep.subr.bf16.mxu0 0
    %937 = vmatpush2.bf16.msra.mxu0 0
    %938 = vmatprep.subr.bf16.mxu0 0
    %939 = vmatpush2.bf16.msra.mxu0 0
    %940 = vmatprep.subr.bf16.mxu0 0
    %941 = vmatpush2.bf16.msra.mxu0 0
    %942 = vmatprep.subr.bf16.mxu0 0
    %943 = vmatpush2.bf16.msra.mxu0 0
    %944 = vmatprep.subr.bf16.mxu0 0
    %945 = vmatpush2.bf16.msra.mxu0 0
    %946 = vmatprep.subr.bf16.mxu0 0
    %947 = vmatpush2.bf16.msra.mxu0 0
    %948 = vmatprep.subr.bf16.mxu0 0
    %949 = vmatpush2.bf16.msra.mxu0 0
    %950 = vmatprep.mubr.bf16.mxu0 0
    %951 = vmatmul.mubr.bf16.gmra.mxu0 %v774
    %v952 = vpop.f32.mrf.mxu0
    %v953 = vadd.f32 0.0, %v952
    %v954 = vpop.f32.mrf.mxu0
    %v955 = vpop.f32.mrf.mxu0
    %v956 = vadd.f32 0.0, %v955
    %v957 = vpop.f32.mrf.mxu0
    %958 = vmatprep.mubr.bf16.mxu0 0
    %959 = vmatmul.mubr.bf16.gmra.mxu0 %v775
    %v960 = vpop.f32.mrf.mxu0
    %v961 = vadd.f32 0.0, %v960
    %v962 = vpop.f32.mrf.mxu0
    %v963 = vpop.f32.mrf.mxu0
    %v964 = vadd.f32 0.0, %v963
    %v965 = vpop.f32.mrf.mxu0
    %966 = vmatprep.mubr.bf16.mxu0 0
    %967 = vmatmul.mubr.bf16.gmra.mxu0 %v776
    %v968 = vpop.f32.mrf.mxu0
    %v969 = vadd.f32 0.0, %v968
    %v970 = vpop.f32.mrf.mxu0
    %v971 = vpop.f32.mrf.mxu0
    %v972 = vadd.f32 0.0, %v971
    %v973 = vpop.f32.mrf.mxu0
    %974 = vmatprep.mubr.bf16.mxu0 0
    %975 = vmatmul.mubr.bf16.gmra.mxu0 %v777
    %v976 = vpop.f32.mrf.mxu0
    %v977 = vadd.f32 0.0, %v976
    %v978 = vpop.f32.mrf.mxu0
    %v979 = vpop.f32.mrf.mxu0
    %v980 = vadd.f32 0.0, %v979
    %v981 = vpop.f32.mrf.mxu0
    %982 = vmatprep.mubr.bf16.mxu0 0
    %983 = vmatmul.mubr.bf16.gmra.mxu0 %v778
    %v984 = vpop.f32.mrf.mxu0
    %v985 = vadd.f32 0.0, %v984
    %v986 = vpop.f32.mrf.mxu0
    %v987 = vpop.f32.mrf.mxu0
    %v988 = vadd.f32 0.0, %v987
    %v989 = vpop.f32.mrf.mxu0
    %990 = vmatprep.mubr.bf16.mxu0 0
    %991 = vmatmul.mubr.bf16.gmra.mxu0 %v779
    %v992 = vpop.f32.mrf.mxu0
    %v993 = vadd.f32 0.0, %v992
    %v994 = vpop.f32.mrf.mxu0
    %v995 = vpop.f32.mrf.mxu0
    %v996 = vadd.f32 0.0, %v995
    %v997 = vpop.f32.mrf.mxu0
    %998 = vmatprep.mubr.bf16.mxu0 0
    %999 = vmatmul.mubr.bf16.gmra.mxu0 %v780
    %v1000 = vpop.f32.mrf.mxu0
    %v1001 = vadd.f32 0.0, %v1000
    %v1002 = vpop.f32.mrf.mxu0
    %v1003 = vpop.f32.mrf.mxu0
    %v1004 = vadd.f32 0.0, %v1003
    %v1005 = vpop.f32.mrf.mxu0
    %1006 = vmatprep.mubr.bf16.mxu0 0
    %1007 = vmatmul.mubr.bf16.gmra.mxu0 %v781
    %v1008 = vpop.f32.mrf.mxu0
    %v1009 = vadd.f32 0.0, %v1008
    %v1010 = vpop.f32.mrf.mxu0
    %v1011 = vpop.f32.mrf.mxu0
    %v1012 = vadd.f32 0.0, %v1011
    %v1013 = vpop.f32.mrf.mxu0
    %1014 = vdwg.mxu0
    %v1015 = vpack.c.bf16 %v956, %v953
    %v1016 = vpack.c.bf16 %v964, %v961
    %v1017 = vpack.c.bf16 %v972, %v969
    %v1018 = vpack.c.bf16 %v980, %v977
    %v1019 = vpack.c.bf16 %v988, %v985
    %v1020 = vpack.c.bf16 %v996, %v993
    %v1021 = vpack.c.bf16 %v1004, %v1001
    %v1022 = vpack.c.bf16 %v1012, %v1009
    %v1031 = vunpack.c.l.b16 %v1015
    %v1032 = vunpack.c.h.b16 %v1015
    %v1033 = vunpack.c.l.b16 %v1016
    %v1034 = vunpack.c.h.b16 %v1016
    %v1035 = vunpack.c.l.b16 %v1017
    %v1036 = vunpack.c.h.b16 %v1017
    %v1037 = vunpack.c.l.b16 %v1018
    %v1038 = vunpack.c.h.b16 %v1018
    %v1039 = vunpack.c.l.b16 %v1019
    %v1040 = vunpack.c.h.b16 %v1019
    %v1041 = vunpack.c.l.b16 %v1020
    %v1042 = vunpack.c.h.b16 %v1020
    %v1043 = vunpack.c.l.b16 %v1021
    %v1044 = vunpack.c.h.b16 %v1021
    %v1045 = vunpack.c.l.b16 %v1022
    %v1046 = vunpack.c.h.b16 %v1022
    %v1047 = vpack.c.b16 %v1031, %v1031
    %v1048 = vpack.c.b16 %v1032, %v1032
    %v1049 = vpack.c.b16 %v1033, %v1033
    %v1050 = vpack.c.b16 %v1034, %v1034
    %v1051 = vpack.c.b16 %v1035, %v1035
    %v1052 = vpack.c.b16 %v1036, %v1036
    %v1053 = vpack.c.b16 %v1037, %v1037
    %v1054 = vpack.c.b16 %v1038, %v1038
    %v1055 = vpack.c.b16 %v1039, %v1039
    %v1056 = vpack.c.b16 %v1040, %v1040
    %v1057 = vpack.c.b16 %v1041, %v1041
    %v1058 = vpack.c.b16 %v1042, %v1042
    %v1059 = vpack.c.b16 %v1043, %v1043
    %v1060 = vpack.c.b16 %v1044, %v1044
    %v1061 = vpack.c.b16 %v1045, %v1045
    %v1062 = vpack.c.b16 %v1046, %v1046
    %1079 = vst [vmem:[%s8] sm:$0xf] %v1047
    %1080 = vst [vmem:[%s8 + $0x4] sm:$0xf] %v1048
    %1081 = vst [vmem:[%s8 + $0x8] sm:$0xf] %v1049
    %1082 = vst [vmem:[%s8 + $0xc] sm:$0xf] %v1050
    %1083 = vst [vmem:[%s8 + $0x10] sm:$0xf] %v1051
    %1084 = vst [vmem:[%s8 + $0x14] sm:$0xf] %v1052
    %1085 = vst [vmem:[%s8 + $0x18] sm:$0xf] %v1053
    %1086 = vst [vmem:[%s8 + $0x1c] sm:$0xf] %v1054
    %1087 = vst [vmem:[%s8 + $0x20] sm:$0xf] %v1055
    %1088 = vst [vmem:[%s8 + $0x24] sm:$0xf] %v1056
    %1089 = vst [vmem:[%s8 + $0x28] sm:$0xf] %v1057
    %1090 = vst [vmem:[%s8 + $0x2c] sm:$0xf] %v1058
    %1091 = vst [vmem:[%s8 + $0x30] sm:$0xf] %v1059
    %1092 = vst [vmem:[%s8 + $0x34] sm:$0xf] %v1060
    %1093 = vst [vmem:[%s8 + $0x38] sm:$0xf] %v1061
    %1094 = vst [vmem:[%s8 + $0x3c] sm:$0xf] %v1062
  $region37: #{graphsage_forward.2} parent=0 // pred_fallthru
    _
  // Predicated region
  $region38: #{graphsage_forward.2} parent=0 // pred_check
    _
  $region39: #{graphsage_forward.2} parent=0 // pred_check_branch
    %1096 = sbr.rel (0) target = $region41
  $region40: #{graphsage_forward.2} parent=0 // pred_region
    _
  $region41: #{graphsage_forward.2} parent=0 // pred_fallthru
    _
  // Predicated region
  $region42: #{graphsage_forward.2} parent=0 // pred_check
    _
  $region43: #{graphsage_forward.2} parent=0 // pred_check_branch
    %1098 = sbr.rel (0) target = $region45
  $region44: #{graphsage_forward.2} parent=0 // pred_region
    _
  $region45: #{graphsage_forward.2} parent=0 // pred_fallthru
    _
  // Predicated region
  $region46: #{graphsage_forward.2} parent=0 // pred_check
    _
  $region47: #{graphsage_forward.2} parent=0 // pred_check_branch
    %1100 = sbr.rel (0) target = $region49
  $region48: #{graphsage_forward.2} parent=0 // pred_region
    _
  $region49: #{graphsage_forward.2} parent=0 // pred_fallthru
    _
  // Predicated region
  $region50: #{graphsage_forward.2} parent=0 // pred_check
    _
  $region51: #{graphsage_forward.2} parent=0 // pred_check_branch
    %1102 = sbr.rel (0) target = $region53
  $region52: #{graphsage_forward.2} parent=0 // pred_region
    _
  $region53: #{graphsage_forward.2} parent=0 // pred_fallthru
    _

</llo_original>
